<compile_context>
chip_gen: v7x
topology: tpu7x:2x2x1
jax: 0.10.0
libtpu: 0.0.40
codegen_flags: <defaults>
</compile_context>

<pallas_src>
import math

import jax
import jax.numpy as jnp
from jax import lax
from jax.experimental import pallas as pl
from jax.experimental.pallas import tpu as pltpu


def _make_kernel(C, TH, Wo, unroll_channels):
    """Kernel closure: C input channels, TH output rows per tile, Wo output cols."""

    def kernel(w_ref, ph_ref, halo_ref, x2_ref, out_ref, gate_scr):
        # w_ref   : SMEM (9*C + 1,) f32   — w[c*9 + kh*3 + kw], bias at [9*C].
        # ph_ref  : VMEM (1, 4*C, RB, Wo+1) phase planes; plane (2a+b)*C + c
        #           holds x1p[c, 2i+a, 2j+b];  RB = TH (tiled) or Ho+1 (T==1).
        # halo_ref: VMEM (1, 1, 4*C, Wo+1) — phase row (t+1)*TH for this tile.
        # x2_ref  : VMEM (1, C2, TH*Wo)   lane-dense flattened NCHW rows.
        # out_ref : VMEM (1, C2, TH*Wo)
        # gate_scr: VMEM (1, TH*Wo) f32 scratch used to relayout the gate.

        def chan(c, carry):
            acc, r, rh = carry
            wb = c * 9
            # phase (a=0, b=0): taps (kh, kw) in {0,2} x {0,2}
            p = ph_ref[0, c, :TH, :].astype(jnp.float32)             # (TH, Wo+1)
            t0, t1 = p[:, :Wo], p[:, 1:]
            acc = acc + w_ref[wb + 0] * t0 + w_ref[wb + 2] * t1
            r = r + w_ref[wb + 6] * t0 + w_ref[wb + 8] * t1
            h = halo_ref[0, 0, pl.ds(c, 1), :].astype(jnp.float32)    # (1, Wo+1)
            rh = rh + w_ref[wb + 6] * h[:, :Wo] + w_ref[wb + 8] * h[:, 1:]
            # phase (a=0, b=1): taps kh in {0,2}, kw = 1
            p = ph_ref[0, C + c, :TH, :].astype(jnp.float32)
            t0 = p[:, :Wo]
            acc = acc + w_ref[wb + 1] * t0
            r = r + w_ref[wb + 7] * t0
            h = halo_ref[0, 0, pl.ds(C + c, 1), :].astype(jnp.float32)
            rh = rh + w_ref[wb + 7] * h[:, :Wo]
            # phase (a=1, b=0): taps kh = 1, kw in {0,2}
            p = ph_ref[0, 2 * C + c, :TH, :].astype(jnp.float32)
            acc = acc + w_ref[wb + 3] * p[:, :Wo] + w_ref[wb + 5] * p[:, 1:]
            # phase (a=1, b=1): tap kh = 1, kw = 1
            p = ph_ref[0, 3 * C + c, :TH, :].astype(jnp.float32)
            acc = acc + w_ref[wb + 4] * p[:, :Wo]
            return acc, r, rh

        zero = jnp.zeros((TH, Wo), jnp.float32)
        carry = (zero, zero, jnp.zeros((1, Wo), jnp.float32))
        if unroll_channels:
            for c in range(C):
                carry = chan(c, carry)
        else:
            # Bounded unroll keeps compile time / live ranges sane at large C.
            carry = lax.fori_loop(0, C, chan, carry, unroll=2)
        acc, r, rh = carry

        # acc holds the kh in {0,1} taps for output row i; r holds the kh=2 taps
        # evaluated at phase row i (needed by output row i-1); rh is the same
        # quantity for the halo row (feeds the tile's last output row).  Emit
        # the gate row-by-row into the lane-flat scratch — the only relayout.
        b = w_ref[9 * C]
        for i in range(TH):
            shifted = r[i + 1:i + 2, :] if i + 1 < TH else rh
            row = jax.nn.sigmoid(acc[i:i + 1, :] + shifted + b)       # (1, Wo)
            gate_scr[0:1, pl.ds(i * Wo, Wo)] = row

        gate = gate_scr[...]                                          # (1, TH*Wo)
        x2 = x2_ref[0].astype(jnp.float32)                            # f32 gating
        out_ref[0] = (x2 * gate).astype(out_ref.dtype)

    return kernel


def _pick_tile_rows(N, C, C2, Ho, Wo, ph_isz, x2_isz, budget):
    """Pick TH (output rows per tile).

    Constraints: TH == Ho (untiled, full-dim blocks, always legal) or
    TH % 8 == 0, TH*Wo % 128 == 0 and TH | Ho (legal, lane-dense tiled blocks).
    Preferences: fit an honest double-buffered VMEM budget, keep the f32
    accumulators register-resident, and give >=2 grid steps when N == 1.
    """
    def rup(x, m):
        return ((x + m - 1) // m) * m

    def per_step_bytes(th, rb):
        ph_b = 2 * 4 * C * rup(rb, 8) * rup(Wo + 1, 128) * ph_isz
        halo_b = 2 * rup(4 * C, 8) * rup(Wo + 1, 128) * ph_isz
        x2o_b = 2 * 2 * rup(C2, 8) * rup(th * Wo, 128) * x2_isz
        scr_b = 8 * rup(th * Wo, 128) * 4
        return ph_b + halo_b + x2o_b + scr_b

    la = 128 // math.gcd(Wo, 128)
    step = 8 * la // math.gcd(8, la)          # lcm(8, 128/gcd(Wo,128))
    reg_cap = 8 * 1024                        # keep acc/r + temporaries in vregs

    tiled = [th for th in range(step, Ho, step) if Ho % th == 0]
    tiled_fit = [th for th in tiled if per_step_bytes(th, th) <= budget]

    def best(cands):
        pref = [t for t in cands if t * Wo <= reg_cap]
        return max(pref) if pref else max(cands)

    full_ok = per_step_bytes(Ho, Ho + 1) <= budget and Ho * Wo <= reg_cap

    if N == 1 and tiled_fit:                  # keep both v7x TensorCores busy
        return best(tiled_fit)
    if full_ok:
        return Ho
    if tiled_fit:
        return best(tiled_fit)
    return Ho                                 # fallback: single tile, rely on vmem_limit


def output_gate(x1, x2, weight, bias):
    """x1: (N, C, H, W), x2: (N, C2, Ho, Wo), weight: (1, C, 3, 3), bias: (1,).
    Returns (N, C2, Ho, Wo) in NCHW, matching the PyTorch module."""
    N, C, H, W = x1.shape
    Ho = (H - 1) // 2 + 1
    Wo = (W - 1) // 2 + 1
    N2, C2, Ho2, Wo2 = x2.shape
    assert N2 == N and (Ho2, Wo2) == (Ho, Wo), "X2 must match conv output shape"

    # --- single fused pad + space-to-depth pass over X1 -----------------------
    # padded spatial dims are exactly (2*Ho+2, 2*Wo+2)
    x1p = jnp.pad(x1, ((0, 0), (0, 0), (1, 2 * Ho + 1 - H), (1, 2 * Wo + 1 - W)))
    # ph[n, (2a+b)*C + c, i, j] = x1p[n, c, 2i + a, 2j + b]
    ph = x1p.reshape(N, C, Ho + 1, 2, Wo + 1, 2)
    ph = jnp.transpose(ph, (0, 3, 5, 1, 2, 4)).reshape(N, 4 * C, Ho + 1, Wo + 1)

    # --- generation-aware VMEM budgets ----------------------------------------
    try:
        vmem_cap = int(pltpu.get_tpu_info().vmem_capacity_bytes)
    except Exception:
        vmem_cap = 128 * 1024 * 1024
    budget = min(12 << 20, vmem_cap // 6)
    vmem_limit = int(min(vmem_cap * 3 // 4, 100 << 20))

    ph_isz = jnp.dtype(x1.dtype).itemsize
    x2_isz = jnp.dtype(x2.dtype).itemsize
    TH = _pick_tile_rows(N, C, C2, Ho, Wo, ph_isz, x2_isz, budget)
    T = Ho // TH
    RB = TH if T > 1 else Ho + 1              # T==1: full-dim block (always legal)

    # per-tile halo rows (phase row (t+1)*TH), laid out as (N, T, 4C, Wo+1)
    halo = jnp.transpose(ph[:, :, TH::TH, :], (0, 2, 1, 3))

    # lane-dense view of X2 / out (free reshape of contiguous NCHW)
    x2f = x2.reshape(N, C2, Ho * Wo)

    # filter flattened (c, kh, kw) + bias, staged in SMEM
    w_smem = jnp.concatenate(
        [weight.reshape(-1), bias.reshape(-1)]).astype(jnp.float32)

    kernel = _make_kernel(C, TH, Wo, unroll_channels=(C <= 16))

    flops = 2 * N * Ho * Wo * (9 * C + C2)
    bytes_accessed = (ph.size + halo.size) * ph_isz + 2 * x2.size * x2_isz \
        + w_smem.size * 4

    outf = pl.pallas_call(
        kernel,
        out_shape=jax.ShapeDtypeStruct((N, C2, Ho * Wo), x2.dtype),
        grid_spec=pltpu.PrefetchScalarGridSpec(
            num_scalar_prefetch=0,
            grid=(N, T),
            in_specs=[
                pl.BlockSpec(memory_space=pltpu.MemorySpace.SMEM),
                pl.BlockSpec((1, 4 * C, RB, Wo + 1), lambda n, t: (n, 0, t, 0)),
                pl.BlockSpec((1, 1, 4 * C, Wo + 1), lambda n, t: (n, t, 0, 0)),
                pl.BlockSpec((1, C2, TH * Wo), lambda n, t: (n, 0, t)),
            ],
            out_specs=pl.BlockSpec((1, C2, TH * Wo), lambda n, t: (n, 0, t)),
            scratch_shapes=[pltpu.VMEM((1, TH * Wo), jnp.float32)],
        ),
        compiler_params=pltpu.CompilerParams(
            dimension_semantics=("parallel", "parallel"),
            vmem_limit_bytes=vmem_limit),
        cost_estimate=pl.CostEstimate(
            flops=flops, transcendentals=N * Ho * Wo,
            bytes_accessed=bytes_accessed),
    )(w_smem, ph, halo, x2f)

    return outf.reshape(N, C2, Ho, Wo)


def _reference(x1, x2, weight, bias):
    conv = lax.conv_general_dilated(
        x1, weight, window_strides=(2, 2), padding=((1, 1), (1, 1)),
        dimension_numbers=("NCHW", "OIHW", "NCHW"))
    conv = conv + bias.reshape(1, 1, 1, 1)
    return x2 * jax.nn.sigmoid(conv)


if __name__ == "__main__":
    key = jax.random.PRNGKey(0)
    k1, k2, k3, k4 = jax.random.split(key, 4)

    N, C, H, W = 2, 4, 16, 16
    Ho, Wo = H // 2, W // 2

    x1 = jax.random.normal(k1, (N, C, H, W), jnp.float32)
    x2 = jax.random.normal(k2, (N, C, Ho, Wo), jnp.float32)

    # deterministic synthetic Conv2d(C -> 1, 3x3) parameters
    weight = jax.random.normal(k3, (1, C, 3, 3), jnp.float32) * 0.1
    bias = jax.random.normal(k4, (1,), jnp.float32) * 0.1

    out = jax.jit(output_gate)(x1, x2, weight, bias)
    out = jax.block_until_ready(out)

    ref = _reference(x1, x2, weight, bias)
    assert out.shape == ref.shape, (out.shape, ref.shape)
    assert jnp.allclose(out, ref, atol=1e-5, rtol=1e-5), "mismatch vs reference"

    print("KERNEL_OK")
</pallas_src>

<mosaic_0001>
module attributes {stable_mosaic.version = 11 : i64} {
  func.func @kernel(%arg0: i32, %arg1: i32, %arg2: memref<37xf32, #tpu.memory_space<smem>>, %arg3: memref<1x16x9x9xf32, #tpu.memory_space<vmem>>, %arg4: memref<1x1x16x9xf32, #tpu.memory_space<vmem>>, %arg5: memref<1x4x64xf32, #tpu.memory_space<vmem>>, %arg6: memref<1x4x64xf32, #tpu.memory_space<vmem>>, %arg7: memref<1x64xf32, #tpu.memory_space<vmem>>) attributes {dimension_semantics = [#tpu.dimension_semantics<parallel>, #tpu.dimension_semantics<parallel>], iteration_bounds = array<i64: 2, 1>, scalar_prefetch = 0 : i64, scratch_operands = 1 : i64, tpu.core_type = #tpu.core_type<tc>, window_params = [{transform_indices = @transform_0, window_bounds = array<i64: 37>}, {transform_indices = @transform_1, window_bounds = array<i64: 1, 16, 9, 9>}, {transform_indices = @transform_2, window_bounds = array<i64: 1, 1, 16, 9>}, {transform_indices = @transform_3, window_bounds = array<i64: 1, 4, 64>}, {transform_indices = @transform_4, window_bounds = array<i64: 1, 4, 64>}]} {
    %cst = arith.constant 0.000000e+00 : f32
    %0 = vector.broadcast %cst : f32 to vector<8x8xf32>
    %cst_0 = arith.constant 0.000000e+00 : f32
    %1 = vector.broadcast %cst_0 : f32 to vector<1x8xf32>
    %c0 = arith.constant 0 : index
    %c0_1 = arith.constant 0 : index
    %c0_2 = arith.constant 0 : index
    %c0_3 = arith.constant 0 : index
    %2 = vector.load %arg3[%c0, %c0_1, %c0_2, %c0_3] : memref<1x16x9x9xf32, #tpu.memory_space<vmem>>, vector<1x1x8x9xf32>
    %3 = vector.shape_cast %2 : vector<1x1x8x9xf32> to vector<8x9xf32>
    %4 = vector.extract_strided_slice %3 {offsets = [0, 0], sizes = [8, 8], strides = [1, 1]} : vector<8x9xf32> to vector<8x8xf32>
    %5 = vector.extract_strided_slice %3 {offsets = [0, 1], sizes = [8, 8], strides = [1, 1]} : vector<8x9xf32> to vector<8x8xf32>
    %c0_4 = arith.constant 0 : index
    %6 = memref.load %arg2[%c0_4] : memref<37xf32, #tpu.memory_space<smem>>
    %7 = vector.broadcast %6 : f32 to vector<8x8xf32>
    %8 = arith.mulf %7, %4 : vector<8x8xf32>
    %9 = arith.addf %0, %8 : vector<8x8xf32>
    %c2 = arith.constant 2 : index
    %10 = memref.load %arg2[%c2] : memref<37xf32, #tpu.memory_space<smem>>
    %11 = vector.broadcast %10 : f32 to vector<8x8xf32>
    %12 = arith.mulf %11, %5 : vector<8x8xf32>
    %13 = arith.addf %9, %12 : vector<8x8xf32>
    %c6 = arith.constant 6 : index
    %14 = memref.load %arg2[%c6] : memref<37xf32, #tpu.memory_space<smem>>
    %15 = vector.broadcast %14 : f32 to vector<8x8xf32>
    %16 = arith.mulf %15, %4 : vector<8x8xf32>
    %17 = arith.addf %0, %16 : vector<8x8xf32>
    %c8 = arith.constant 8 : index
    %18 = memref.load %arg2[%c8] : memref<37xf32, #tpu.memory_space<smem>>
    %19 = vector.broadcast %18 : f32 to vector<8x8xf32>
    %20 = arith.mulf %19, %5 : vector<8x8xf32>
    %21 = arith.addf %17, %20 : vector<8x8xf32>
    %c0_5 = arith.constant 0 : index
    %c0_6 = arith.constant 0 : index
    %c0_7 = arith.constant 0 : index
    %c0_8 = arith.constant 0 : index
    %22 = vector.load %arg4[%c0_5, %c0_6, %c0_7, %c0_8] : memref<1x1x16x9xf32, #tpu.memory_space<vmem>>, vector<1x1x1x9xf32>
    %23 = vector.shape_cast %22 : vector<1x1x1x9xf32> to vector<1x9xf32>
    %c6_9 = arith.constant 6 : index
    %24 = memref.load %arg2[%c6_9] : memref<37xf32, #tpu.memory_space<smem>>
    %25 = vector.extract_strided_slice %23 {offsets = [0, 0], sizes = [1, 8], strides = [1, 1]} : vector<1x9xf32> to vector<1x8xf32>
    %26 = vector.broadcast %24 : f32 to vector<1x8xf32>
    %27 = arith.mulf %26, %25 : vector<1x8xf32>
    %28 = arith.addf %1, %27 : vector<1x8xf32>
    %c8_10 = arith.constant 8 : index
    %29 = memref.load %arg2[%c8_10] : memref<37xf32, #tpu.memory_space<smem>>
    %30 = vector.extract_strided_slice %23 {offsets = [0, 1], sizes = [1, 8], strides = [1, 1]} : vector<1x9xf32> to vector<1x8xf32>
    %31 = vector.broadcast %29 : f32 to vector<1x8xf32>
    %32 = arith.mulf %31, %30 : vector<1x8xf32>
    %33 = arith.addf %28, %32 : vector<1x8xf32>
    %c0_11 = arith.constant 0 : index
    %c4 = arith.constant 4 : index
    %c0_12 = arith.constant 0 : index
    %c0_13 = arith.constant 0 : index
    %34 = vector.load %arg3[%c0_11, %c4, %c0_12, %c0_13] : memref<1x16x9x9xf32, #tpu.memory_space<vmem>>, vector<1x1x8x9xf32>
    %35 = vector.shape_cast %34 : vector<1x1x8x9xf32> to vector<8x9xf32>
    %36 = vector.extract_strided_slice %35 {offsets = [0, 0], sizes = [8, 8], strides = [1, 1]} : vector<8x9xf32> to vector<8x8xf32>
    %c1 = arith.constant 1 : index
    %37 = memref.load %arg2[%c1] : memref<37xf32, #tpu.memory_space<smem>>
    %38 = vector.broadcast %37 : f32 to vector<8x8xf32>
    %39 = arith.mulf %38, %36 : vector<8x8xf32>
    %40 = arith.addf %13, %39 : vector<8x8xf32>
    %c7 = arith.constant 7 : index
    %41 = memref.load %arg2[%c7] : memref<37xf32, #tpu.memory_space<smem>>
    %42 = vector.broadcast %41 : f32 to vector<8x8xf32>
    %43 = arith.mulf %42, %36 : vector<8x8xf32>
    %44 = arith.addf %21, %43 : vector<8x8xf32>
    %c0_14 = arith.constant 0 : index
    %c0_15 = arith.constant 0 : index
    %c4_16 = arith.constant 4 : index
    %c0_17 = arith.constant 0 : index
    %45 = vector.load %arg4[%c0_14, %c0_15, %c4_16, %c0_17] : memref<1x1x16x9xf32, #tpu.memory_space<vmem>>, vector<1x1x1x9xf32>
    %46 = vector.shape_cast %45 : vector<1x1x1x9xf32> to vector<1x9xf32>
    %c7_18 = arith.constant 7 : index
    %47 = memref.load %arg2[%c7_18] : memref<37xf32, #tpu.memory_space<smem>>
    %48 = vector.extract_strided_slice %46 {offsets = [0, 0], sizes = [1, 8], strides = [1, 1]} : vector<1x9xf32> to vector<1x8xf32>
    %49 = vector.broadcast %47 : f32 to vector<1x8xf32>
    %50 = arith.mulf %49, %48 : vector<1x8xf32>
    %51 = arith.addf %33, %50 : vector<1x8xf32>
    %c0_19 = arith.constant 0 : index
    %c8_20 = arith.constant 8 : index
    %c0_21 = arith.constant 0 : index
    %c0_22 = arith.constant 0 : index
    %52 = vector.load %arg3[%c0_19, %c8_20, %c0_21, %c0_22] : memref<1x16x9x9xf32, #tpu.memory_space<vmem>>, vector<1x1x8x9xf32>
    %53 = vector.shape_cast %52 : vector<1x1x8x9xf32> to vector<8x9xf32>
    %c3 = arith.constant 3 : index
    %54 = memref.load %arg2[%c3] : memref<37xf32, #tpu.memory_space<smem>>
    %55 = vector.extract_strided_slice %53 {offsets = [0, 0], sizes = [8, 8], strides = [1, 1]} : vector<8x9xf32> to vector<8x8xf32>
    %56 = vector.broadcast %54 : f32 to vector<8x8xf32>
    %57 = arith.mulf %56, %55 : vector<8x8xf32>
    %58 = arith.addf %40, %57 : vector<8x8xf32>
    %c5 = arith.constant 5 : index
    %59 = memref.load %arg2[%c5] : memref<37xf32, #tpu.memory_space<smem>>
    %60 = vector.extract_strided_slice %53 {offsets = [0, 1], sizes = [8, 8], strides = [1, 1]} : vector<8x9xf32> to vector<8x8xf32>
    %61 = vector.broadcast %59 : f32 to vector<8x8xf32>
    %62 = arith.mulf %61, %60 : vector<8x8xf32>
    %63 = arith.addf %58, %62 : vector<8x8xf32>
    %c0_23 = arith.constant 0 : index
    %c12 = arith.constant 12 : index
    %c0_24 = arith.constant 0 : index
    %c0_25 = arith.constant 0 : index
    %64 = vector.load %arg3[%c0_23, %c12, %c0_24, %c0_25] : memref<1x16x9x9xf32, #tpu.memory_space<vmem>>, vector<1x1x8x9xf32>
    %65 = vector.shape_cast %64 : vector<1x1x8x9xf32> to vector<8x9xf32>
    %c4_26 = arith.constant 4 : index
    %66 = memref.load %arg2[%c4_26] : memref<37xf32, #tpu.memory_space<smem>>
    %67 = vector.extract_strided_slice %65 {offsets = [0, 0], sizes = [8, 8], strides = [1, 1]} : vector<8x9xf32> to vector<8x8xf32>
    %68 = vector.broadcast %66 : f32 to vector<8x8xf32>
    %69 = arith.mulf %68, %67 : vector<8x8xf32>
    %70 = arith.addf %63, %69 : vector<8x8xf32>
    %c0_27 = arith.constant 0 : index
    %c1_28 = arith.constant 1 : index
    %c0_29 = arith.constant 0 : index
    %c0_30 = arith.constant 0 : index
    %71 = vector.load %arg3[%c0_27, %c1_28, %c0_29, %c0_30] : memref<1x16x9x9xf32, #tpu.memory_space<vmem>>, vector<1x1x8x9xf32>
    %72 = vector.shape_cast %71 : vector<1x1x8x9xf32> to vector<8x9xf32>
    %73 = vector.extract_strided_slice %72 {offsets = [0, 0], sizes = [8, 8], strides = [1, 1]} : vector<8x9xf32> to vector<8x8xf32>
    %74 = vector.extract_strided_slice %72 {offsets = [0, 1], sizes = [8, 8], strides = [1, 1]} : vector<8x9xf32> to vector<8x8xf32>
    %c9 = arith.constant 9 : index
    %75 = memref.load %arg2[%c9] : memref<37xf32, #tpu.memory_space<smem>>
    %76 = vector.broadcast %75 : f32 to vector<8x8xf32>
    %77 = arith.mulf %76, %73 : vector<8x8xf32>
    %78 = arith.addf %70, %77 : vector<8x8xf32>
    %c11 = arith.constant 11 : index
    %79 = memref.load %arg2[%c11] : memref<37xf32, #tpu.memory_space<smem>>
    %80 = vector.broadcast %79 : f32 to vector<8x8xf32>
    %81 = arith.mulf %80, %74 : vector<8x8xf32>
    %82 = arith.addf %78, %81 : vector<8x8xf32>
    %c15 = arith.constant 15 : index
    %83 = memref.load %arg2[%c15] : memref<37xf32, #tpu.memory_space<smem>>
    %84 = vector.broadcast %83 : f32 to vector<8x8xf32>
    %85 = arith.mulf %84, %73 : vector<8x8xf32>
    %86 = arith.addf %44, %85 : vector<8x8xf32>
    %c17 = arith.constant 17 : index
    %87 = memref.load %arg2[%c17] : memref<37xf32, #tpu.memory_space<smem>>
    %88 = vector.broadcast %87 : f32 to vector<8x8xf32>
    %89 = arith.mulf %88, %74 : vector<8x8xf32>
    %90 = arith.addf %86, %89 : vector<8x8xf32>
    %c0_31 = arith.constant 0 : index
    %c0_32 = arith.constant 0 : index
    %c1_33 = arith.constant 1 : index
    %c0_34 = arith.constant 0 : index
    %91 = vector.load %arg4[%c0_31, %c0_32, %c1_33, %c0_34] : memref<1x1x16x9xf32, #tpu.memory_space<vmem>>, vector<1x1x1x9xf32>
    %92 = vector.shape_cast %91 : vector<1x1x1x9xf32> to vector<1x9xf32>
    %c15_35 = arith.constant 15 : index
    %93 = memref.load %arg2[%c15_35] : memref<37xf32, #tpu.memory_space<smem>>
    %94 = vector.extract_strided_slice %92 {offsets = [0, 0], sizes = [1, 8], strides = [1, 1]} : vector<1x9xf32> to vector<1x8xf32>
    %95 = vector.broadcast %93 : f32 to vector<1x8xf32>
    %96 = arith.mulf %95, %94 : vector<1x8xf32>
    %97 = arith.addf %51, %96 : vector<1x8xf32>
    %c17_36 = arith.constant 17 : index
    %98 = memref.load %arg2[%c17_36] : memref<37xf32, #tpu.memory_space<smem>>
    %99 = vector.extract_strided_slice %92 {offsets = [0, 1], sizes = [1, 8], strides = [1, 1]} : vector<1x9xf32> to vector<1x8xf32>
    %100 = vector.broadcast %98 : f32 to vector<1x8xf32>
    %101 = arith.mulf %100, %99 : vector<1x8xf32>
    %102 = arith.addf %97, %101 : vector<1x8xf32>
    %c0_37 = arith.constant 0 : index
    %c5_38 = arith.constant 5 : index
    %c0_39 = arith.constant 0 : index
    %c0_40 = arith.constant 0 : index
    %103 = vector.load %arg3[%c0_37, %c5_38, %c0_39, %c0_40] : memref<1x16x9x9xf32, #tpu.memory_space<vmem>>, vector<1x1x8x9xf32>
    %104 = vector.shape_cast %103 : vector<1x1x8x9xf32> to vector<8x9xf32>
    %105 = vector.extract_strided_slice %104 {offsets = [0, 0], sizes = [8, 8], strides = [1, 1]} : vector<8x9xf32> to vector<8x8xf32>
    %c10 = arith.constant 10 : index
    %106 = memref.load %arg2[%c10] : memref<37xf32, #tpu.memory_space<smem>>
    %107 = vector.broadcast %106 : f32 to vector<8x8xf32>
    %108 = arith.mulf %107, %105 : vector<8x8xf32>
    %109 = arith.addf %82, %108 : vector<8x8xf32>
    %c16 = arith.constant 16 : index
    %110 = memref.load %arg2[%c16] : memref<37xf32, #tpu.memory_space<smem>>
    %111 = vector.broadcast %110 : f32 to vector<8x8xf32>
    %112 = arith.mulf %111, %105 : vector<8x8xf32>
    %113 = arith.addf %90, %112 : vector<8x8xf32>
    %c0_41 = arith.constant 0 : index
    %c0_42 = arith.constant 0 : index
    %c5_43 = arith.constant 5 : index
    %c0_44 = arith.constant 0 : index
    %114 = vector.load %arg4[%c0_41, %c0_42, %c5_43, %c0_44] : memref<1x1x16x9xf32, #tpu.memory_space<vmem>>, vector<1x1x1x9xf32>
    %115 = vector.shape_cast %114 : vector<1x1x1x9xf32> to vector<1x9xf32>
    %c16_45 = arith.constant 16 : index
    %116 = memref.load %arg2[%c16_45] : memref<37xf32, #tpu.memory_space<smem>>
    %117 = vector.extract_strided_slice %115 {offsets = [0, 0], sizes = [1, 8], strides = [1, 1]} : vector<1x9xf32> to vector<1x8xf32>
    %118 = vector.broadcast %116 : f32 to vector<1x8xf32>
    %119 = arith.mulf %118, %117 : vector<1x8xf32>
    %120 = arith.addf %102, %119 : vector<1x8xf32>
    %c0_46 = arith.constant 0 : index
    %c9_47 = arith.constant 9 : index
    %c0_48 = arith.constant 0 : index
    %c0_49 = arith.constant 0 : index
    %121 = vector.load %arg3[%c0_46, %c9_47, %c0_48, %c0_49] : memref<1x16x9x9xf32, #tpu.memory_space<vmem>>, vector<1x1x8x9xf32>
    %122 = vector.shape_cast %121 : vector<1x1x8x9xf32> to vector<8x9xf32>
    %c12_50 = arith.constant 12 : index
    %123 = memref.load %arg2[%c12_50] : memref<37xf32, #tpu.memory_space<smem>>
    %124 = vector.extract_strided_slice %122 {offsets = [0, 0], sizes = [8, 8], strides = [1, 1]} : vector<8x9xf32> to vector<8x8xf32>
    %125 = vector.broadcast %123 : f32 to vector<8x8xf32>
    %126 = arith.mulf %125, %124 : vector<8x8xf32>
    %127 = arith.addf %109, %126 : vector<8x8xf32>
    %c14 = arith.constant 14 : index
    %128 = memref.load %arg2[%c14] : memref<37xf32, #tpu.memory_space<smem>>
    %129 = vector.extract_strided_slice %122 {offsets = [0, 1], sizes = [8, 8], strides = [1, 1]} : vector<8x9xf32> to vector<8x8xf32>
    %130 = vector.broadcast %128 : f32 to vector<8x8xf32>
    %131 = arith.mulf %130, %129 : vector<8x8xf32>
    %132 = arith.addf %127, %131 : vector<8x8xf32>
    %c0_51 = arith.constant 0 : index
    %c13 = arith.constant 13 : index
    %c0_52 = arith.constant 0 : index
    %c0_53 = arith.constant 0 : index
    %133 = vector.load %arg3[%c0_51, %c13, %c0_52, %c0_53] : memref<1x16x9x9xf32, #tpu.memory_space<vmem>>, vector<1x1x8x9xf32>
    %134 = vector.shape_cast %133 : vector<1x1x8x9xf32> to vector<8x9xf32>
    %c13_54 = arith.constant 13 : index
    %135 = memref.load %arg2[%c13_54] : memref<37xf32, #tpu.memory_space<smem>>
    %136 = vector.extract_strided_slice %134 {offsets = [0, 0], sizes = [8, 8], strides = [1, 1]} : vector<8x9xf32> to vector<8x8xf32>
    %137 = vector.broadcast %135 : f32 to vector<8x8xf32>
    %138 = arith.mulf %137, %136 : vector<8x8xf32>
    %139 = arith.addf %132, %138 : vector<8x8xf32>
    %c0_55 = arith.constant 0 : index
    %c2_56 = arith.constant 2 : index
    %c0_57 = arith.constant 0 : index
    %c0_58 = arith.constant 0 : index
    %140 = vector.load %arg3[%c0_55, %c2_56, %c0_57, %c0_58] : memref<1x16x9x9xf32, #tpu.memory_space<vmem>>, vector<1x1x8x9xf32>
    %141 = vector.shape_cast %140 : vector<1x1x8x9xf32> to vector<8x9xf32>
    %142 = vector.extract_strided_slice %141 {offsets = [0, 0], sizes = [8, 8], strides = [1, 1]} : vector<8x9xf32> to vector<8x8xf32>
    %143 = vector.extract_strided_slice %141 {offsets = [0, 1], sizes = [8, 8], strides = [1, 1]} : vector<8x9xf32> to vector<8x8xf32>
    %c18 = arith.constant 18 : index
    %144 = memref.load %arg2[%c18] : memref<37xf32, #tpu.memory_space<smem>>
    %145 = vector.broadcast %144 : f32 to vector<8x8xf32>
    %146 = arith.mulf %145, %142 : vector<8x8xf32>
    %147 = arith.addf %139, %146 : vector<8x8xf32>
    %c20 = arith.constant 20 : index
    %148 = memref.load %arg2[%c20] : memref<37xf32, #tpu.memory_space<smem>>
    %149 = vector.broadcast %148 : f32 to vector<8x8xf32>
    %150 = arith.mulf %149, %143 : vector<8x8xf32>
    %151 = arith.addf %147, %150 : vector<8x8xf32>
    %c24 = arith.constant 24 : index
    %152 = memref.load %arg2[%c24] : memref<37xf32, #tpu.memory_space<smem>>
    %153 = vector.broadcast %152 : f32 to vector<8x8xf32>
    %154 = arith.mulf %153, %142 : vector<8x8xf32>
    %155 = arith.addf %113, %154 : vector<8x8xf32>
    %c26 = arith.constant 26 : index
    %156 = memref.load %arg2[%c26] : memref<37xf32, #tpu.memory_space<smem>>
    %157 = vector.broadcast %156 : f32 to vector<8x8xf32>
    %158 = arith.mulf %157, %143 : vector<8x8xf32>
    %159 = arith.addf %155, %158 : vector<8x8xf32>
    %c0_59 = arith.constant 0 : index
    %c0_60 = arith.constant 0 : index
    %c2_61 = arith.constant 2 : index
    %c0_62 = arith.constant 0 : index
    %160 = vector.load %arg4[%c0_59, %c0_60, %c2_61, %c0_62] : memref<1x1x16x9xf32, #tpu.memory_space<vmem>>, vector<1x1x1x9xf32>
    %161 = vector.shape_cast %160 : vector<1x1x1x9xf32> to vector<1x9xf32>
    %c24_63 = arith.constant 24 : index
    %162 = memref.load %arg2[%c24_63] : memref<37xf32, #tpu.memory_space<smem>>
    %163 = vector.extract_strided_slice %161 {offsets = [0, 0], sizes = [1, 8], strides = [1, 1]} : vector<1x9xf32> to vector<1x8xf32>
    %164 = vector.broadcast %162 : f32 to vector<1x8xf32>
    %165 = arith.mulf %164, %163 : vector<1x8xf32>
    %166 = arith.addf %120, %165 : vector<1x8xf32>
    %c26_64 = arith.constant 26 : index
    %167 = memref.load %arg2[%c26_64] : memref<37xf32, #tpu.memory_space<smem>>
    %168 = vector.extract_strided_slice %161 {offsets = [0, 1], sizes = [1, 8], strides = [1, 1]} : vector<1x9xf32> to vector<1x8xf32>
    %169 = vector.broadcast %167 : f32 to vector<1x8xf32>
    %170 = arith.mulf %169, %168 : vector<1x8xf32>
    %171 = arith.addf %166, %170 : vector<1x8xf32>
    %c0_65 = arith.constant 0 : index
    %c6_66 = arith.constant 6 : index
    %c0_67 = arith.constant 0 : index
    %c0_68 = arith.constant 0 : index
    %172 = vector.load %arg3[%c0_65, %c6_66, %c0_67, %c0_68] : memref<1x16x9x9xf32, #tpu.memory_space<vmem>>, vector<1x1x8x9xf32>
    %173 = vector.shape_cast %172 : vector<1x1x8x9xf32> to vector<8x9xf32>
    %174 = vector.extract_strided_slice %173 {offsets = [0, 0], sizes = [8, 8], strides = [1, 1]} : vector<8x9xf32> to vector<8x8xf32>
    %c19 = arith.constant 19 : index
    %175 = memref.load %arg2[%c19] : memref<37xf32, #tpu.memory_space<smem>>
    %176 = vector.broadcast %175 : f32 to vector<8x8xf32>
    %177 = arith.mulf %176, %174 : vector<8x8xf32>
    %178 = arith.addf %151, %177 : vector<8x8xf32>
    %c25 = arith.constant 25 : index
    %179 = memref.load %arg2[%c25] : memref<37xf32, #tpu.memory_space<smem>>
    %180 = vector.broadcast %179 : f32 to vector<8x8xf32>
    %181 = arith.mulf %180, %174 : vector<8x8xf32>
    %182 = arith.addf %159, %181 : vector<8x8xf32>
    %c0_69 = arith.constant 0 : index
    %c0_70 = arith.constant 0 : index
    %c6_71 = arith.constant 6 : index
    %c0_72 = arith.constant 0 : index
    %183 = vector.load %arg4[%c0_69, %c0_70, %c6_71, %c0_72] : memref<1x1x16x9xf32, #tpu.memory_space<vmem>>, vector<1x1x1x9xf32>
    %184 = vector.shape_cast %183 : vector<1x1x1x9xf32> to vector<1x9xf32>
    %c25_73 = arith.constant 25 : index
    %185 = memref.load %arg2[%c25_73] : memref<37xf32, #tpu.memory_space<smem>>
    %186 = vector.extract_strided_slice %184 {offsets = [0, 0], sizes = [1, 8], strides = [1, 1]} : vector<1x9xf32> to vector<1x8xf32>
    %187 = vector.broadcast %185 : f32 to vector<1x8xf32>
    %188 = arith.mulf %187, %186 : vector<1x8xf32>
    %189 = arith.addf %171, %188 : vector<1x8xf32>
    %c0_74 = arith.constant 0 : index
    %c10_75 = arith.constant 10 : index
    %c0_76 = arith.constant 0 : index
    %c0_77 = arith.constant 0 : index
    %190 = vector.load %arg3[%c0_74, %c10_75, %c0_76, %c0_77] : memref<1x16x9x9xf32, #tpu.memory_space<vmem>>, vector<1x1x8x9xf32>
    %191 = vector.shape_cast %190 : vector<1x1x8x9xf32> to vector<8x9xf32>
    %c21 = arith.constant 21 : index
    %192 = memref.load %arg2[%c21] : memref<37xf32, #tpu.memory_space<smem>>
    %193 = vector.extract_strided_slice %191 {offsets = [0, 0], sizes = [8, 8], strides = [1, 1]} : vector<8x9xf32> to vector<8x8xf32>
    %194 = vector.broadcast %192 : f32 to vector<8x8xf32>
    %195 = arith.mulf %194, %193 : vector<8x8xf32>
    %196 = arith.addf %178, %195 : vector<8x8xf32>
    %c23 = arith.constant 23 : index
    %197 = memref.load %arg2[%c23] : memref<37xf32, #tpu.memory_space<smem>>
    %198 = vector.extract_strided_slice %191 {offsets = [0, 1], sizes = [8, 8], strides = [1, 1]} : vector<8x9xf32> to vector<8x8xf32>
    %199 = vector.broadcast %197 : f32 to vector<8x8xf32>
    %200 = arith.mulf %199, %198 : vector<8x8xf32>
    %201 = arith.addf %196, %200 : vector<8x8xf32>
    %c0_78 = arith.constant 0 : index
    %c14_79 = arith.constant 14 : index
    %c0_80 = arith.constant 0 : index
    %c0_81 = arith.constant 0 : index
    %202 = vector.load %arg3[%c0_78, %c14_79, %c0_80, %c0_81] : memref<1x16x9x9xf32, #tpu.memory_space<vmem>>, vector<1x1x8x9xf32>
    %203 = vector.shape_cast %202 : vector<1x1x8x9xf32> to vector<8x9xf32>
    %c22 = arith.constant 22 : index
    %204 = memref.load %arg2[%c22] : memref<37xf32, #tpu.memory_space<smem>>
    %205 = vector.extract_strided_slice %203 {offsets = [0, 0], sizes = [8, 8], strides = [1, 1]} : vector<8x9xf32> to vector<8x8xf32>
    %206 = vector.broadcast %204 : f32 to vector<8x8xf32>
    %207 = arith.mulf %206, %205 : vector<8x8xf32>
    %208 = arith.addf %201, %207 : vector<8x8xf32>
    %c0_82 = arith.constant 0 : index
    %c3_83 = arith.constant 3 : index
    %c0_84 = arith.constant 0 : index
    %c0_85 = arith.constant 0 : index
    %209 = vector.load %arg3[%c0_82, %c3_83, %c0_84, %c0_85] : memref<1x16x9x9xf32, #tpu.memory_space<vmem>>, vector<1x1x8x9xf32>
    %210 = vector.shape_cast %209 : vector<1x1x8x9xf32> to vector<8x9xf32>
    %211 = vector.extract_strided_slice %210 {offsets = [0, 0], sizes = [8, 8], strides = [1, 1]} : vector<8x9xf32> to vector<8x8xf32>
    %212 = vector.extract_strided_slice %210 {offsets = [0, 1], sizes = [8, 8], strides = [1, 1]} : vector<8x9xf32> to vector<8x8xf32>
    %c27 = arith.constant 27 : index
    %213 = memref.load %arg2[%c27] : memref<37xf32, #tpu.memory_space<smem>>
    %214 = vector.broadcast %213 : f32 to vector<8x8xf32>
    %215 = arith.mulf %214, %211 : vector<8x8xf32>
    %216 = arith.addf %208, %215 : vector<8x8xf32>
    %c29 = arith.constant 29 : index
    %217 = memref.load %arg2[%c29] : memref<37xf32, #tpu.memory_space<smem>>
    %218 = vector.broadcast %217 : f32 to vector<8x8xf32>
    %219 = arith.mulf %218, %212 : vector<8x8xf32>
    %220 = arith.addf %216, %219 : vector<8x8xf32>
    %c33 = arith.constant 33 : index
    %221 = memref.load %arg2[%c33] : memref<37xf32, #tpu.memory_space<smem>>
    %222 = vector.broadcast %221 : f32 to vector<8x8xf32>
    %223 = arith.mulf %222, %211 : vector<8x8xf32>
    %224 = arith.addf %182, %223 : vector<8x8xf32>
    %c35 = arith.constant 35 : index
    %225 = memref.load %arg2[%c35] : memref<37xf32, #tpu.memory_space<smem>>
    %226 = vector.broadcast %225 : f32 to vector<8x8xf32>
    %227 = arith.mulf %226, %212 : vector<8x8xf32>
    %228 = arith.addf %224, %227 : vector<8x8xf32>
    %c0_86 = arith.constant 0 : index
    %c0_87 = arith.constant 0 : index
    %c3_88 = arith.constant 3 : index
    %c0_89 = arith.constant 0 : index
    %229 = vector.load %arg4[%c0_86, %c0_87, %c3_88, %c0_89] : memref<1x1x16x9xf32, #tpu.memory_space<vmem>>, vector<1x1x1x9xf32>
    %230 = vector.shape_cast %229 : vector<1x1x1x9xf32> to vector<1x9xf32>
    %c33_90 = arith.constant 33 : index
    %231 = memref.load %arg2[%c33_90] : memref<37xf32, #tpu.memory_space<smem>>
    %232 = vector.extract_strided_slice %230 {offsets = [0, 0], sizes = [1, 8], strides = [1, 1]} : vector<1x9xf32> to vector<1x8xf32>
    %233 = vector.broadcast %231 : f32 to vector<1x8xf32>
    %234 = arith.mulf %233, %232 : vector<1x8xf32>
    %235 = arith.addf %189, %234 : vector<1x8xf32>
    %c35_91 = arith.constant 35 : index
    %236 = memref.load %arg2[%c35_91] : memref<37xf32, #tpu.memory_space<smem>>
    %237 = vector.extract_strided_slice %230 {offsets = [0, 1], sizes = [1, 8], strides = [1, 1]} : vector<1x9xf32> to vector<1x8xf32>
    %238 = vector.broadcast %236 : f32 to vector<1x8xf32>
    %239 = arith.mulf %238, %237 : vector<1x8xf32>
    %240 = arith.addf %235, %239 : vector<1x8xf32>
    %c0_92 = arith.constant 0 : index
    %c7_93 = arith.constant 7 : index
    %c0_94 = arith.constant 0 : index
    %c0_95 = arith.constant 0 : index
    %241 = vector.load %arg3[%c0_92, %c7_93, %c0_94, %c0_95] : memref<1x16x9x9xf32, #tpu.memory_space<vmem>>, vector<1x1x8x9xf32>
    %242 = vector.shape_cast %241 : vector<1x1x8x9xf32> to vector<8x9xf32>
    %243 = vector.extract_strided_slice %242 {offsets = [0, 0], sizes = [8, 8], strides = [1, 1]} : vector<8x9xf32> to vector<8x8xf32>
    %c28 = arith.constant 28 : index
    %244 = memref.load %arg2[%c28] : memref<37xf32, #tpu.memory_space<smem>>
    %245 = vector.broadcast %244 : f32 to vector<8x8xf32>
    %246 = arith.mulf %245, %243 : vector<8x8xf32>
    %247 = arith.addf %220, %246 : vector<8x8xf32>
    %c34 = arith.constant 34 : index
    %248 = memref.load %arg2[%c34] : memref<37xf32, #tpu.memory_space<smem>>
    %249 = vector.broadcast %248 : f32 to vector<8x8xf32>
    %250 = arith.mulf %249, %243 : vector<8x8xf32>
    %251 = arith.addf %228, %250 : vector<8x8xf32>
    %c0_96 = arith.constant 0 : index
    %c0_97 = arith.constant 0 : index
    %c7_98 = arith.constant 7 : index
    %c0_99 = arith.constant 0 : index
    %252 = vector.load %arg4[%c0_96, %c0_97, %c7_98, %c0_99] : memref<1x1x16x9xf32, #tpu.memory_space<vmem>>, vector<1x1x1x9xf32>
    %253 = vector.shape_cast %252 : vector<1x1x1x9xf32> to vector<1x9xf32>
    %c34_100 = arith.constant 34 : index
    %254 = memref.load %arg2[%c34_100] : memref<37xf32, #tpu.memory_space<smem>>
    %255 = vector.extract_strided_slice %253 {offsets = [0, 0], sizes = [1, 8], strides = [1, 1]} : vector<1x9xf32> to vector<1x8xf32>
    %256 = vector.broadcast %254 : f32 to vector<1x8xf32>
    %257 = arith.mulf %256, %255 : vector<1x8xf32>
    %258 = arith.addf %240, %257 : vector<1x8xf32>
    %c0_101 = arith.constant 0 : index
    %c11_102 = arith.constant 11 : index
    %c0_103 = arith.constant 0 : index
    %c0_104 = arith.constant 0 : index
    %259 = vector.load %arg3[%c0_101, %c11_102, %c0_103, %c0_104] : memref<1x16x9x9xf32, #tpu.memory_space<vmem>>, vector<1x1x8x9xf32>
    %260 = vector.shape_cast %259 : vector<1x1x8x9xf32> to vector<8x9xf32>
    %c30 = arith.constant 30 : index
    %261 = memref.load %arg2[%c30] : memref<37xf32, #tpu.memory_space<smem>>
    %262 = vector.extract_strided_slice %260 {offsets = [0, 0], sizes = [8, 8], strides = [1, 1]} : vector<8x9xf32> to vector<8x8xf32>
    %263 = vector.broadcast %261 : f32 to vector<8x8xf32>
    %264 = arith.mulf %263, %262 : vector<8x8xf32>
    %265 = arith.addf %247, %264 : vector<8x8xf32>
    %c32 = arith.constant 32 : index
    %266 = memref.load %arg2[%c32] : memref<37xf32, #tpu.memory_space<smem>>
    %267 = vector.extract_strided_slice %260 {offsets = [0, 1], sizes = [8, 8], strides = [1, 1]} : vector<8x9xf32> to vector<8x8xf32>
    %268 = vector.broadcast %266 : f32 to vector<8x8xf32>
    %269 = arith.mulf %268, %267 : vector<8x8xf32>
    %270 = arith.addf %265, %269 : vector<8x8xf32>
    %c0_105 = arith.constant 0 : index
    %c15_106 = arith.constant 15 : index
    %c0_107 = arith.constant 0 : index
    %c0_108 = arith.constant 0 : index
    %271 = vector.load %arg3[%c0_105, %c15_106, %c0_107, %c0_108] : memref<1x16x9x9xf32, #tpu.memory_space<vmem>>, vector<1x1x8x9xf32>
    %272 = vector.shape_cast %271 : vector<1x1x8x9xf32> to vector<8x9xf32>
    %c31 = arith.constant 31 : index
    %273 = memref.load %arg2[%c31] : memref<37xf32, #tpu.memory_space<smem>>
    %274 = vector.extract_strided_slice %272 {offsets = [0, 0], sizes = [8, 8], strides = [1, 1]} : vector<8x9xf32> to vector<8x8xf32>
    %275 = vector.broadcast %273 : f32 to vector<8x8xf32>
    %276 = arith.mulf %275, %274 : vector<8x8xf32>
    %277 = arith.addf %270, %276 : vector<8x8xf32>
    %c36 = arith.constant 36 : index
    %278 = memref.load %arg2[%c36] : memref<37xf32, #tpu.memory_space<smem>>
    %279 = vector.extract_strided_slice %251 {offsets = [1, 0], sizes = [1, 8], strides = [1, 1]} : vector<8x8xf32> to vector<1x8xf32>
    %280 = vector.extract_strided_slice %277 {offsets = [0, 0], sizes = [1, 8], strides = [1, 1]} : vector<8x8xf32> to vector<1x8xf32>
    %281 = arith.addf %280, %279 : vector<1x8xf32>
    %282 = vector.broadcast %278 : f32 to vector<1x8xf32>
    %283 = arith.addf %281, %282 : vector<1x8xf32>
    %284 = arith.negf %283 : vector<1x8xf32>
    %285 = math.exp %284 : vector<1x8xf32>
    %cst_109 = arith.constant 1.000000e+00 : f32
    %286 = vector.broadcast %cst_109 : f32 to vector<1x8xf32>
    %287 = arith.addf %286, %285 : vector<1x8xf32>
    %288 = arith.divf %286, %287 : vector<1x8xf32>
    %c0_110 = arith.constant 0 : index
    %c0_111 = arith.constant 0 : index
    %289 = vector.load %arg7[%c0_110, %c0_111] : memref<1x64xf32, #tpu.memory_space<vmem>>, vector<1x8xf32>
    tpu.vector_store %arg7[%c0_110, %c0_111], %288 {strides = array<i32>} : memref<1x64xf32, #tpu.memory_space<vmem>>, vector<1x8xf32>,
    %290 = vector.extract_strided_slice %251 {offsets = [2, 0], sizes = [1, 8], strides = [1, 1]} : vector<8x8xf32> to vector<1x8xf32>
    %291 = vector.extract_strided_slice %277 {offsets = [1, 0], sizes = [1, 8], strides = [1, 1]} : vector<8x8xf32> to vector<1x8xf32>
    %292 = arith.addf %291, %290 : vector<1x8xf32>
    %293 = vector.broadcast %278 : f32 to vector<1x8xf32>
    %294 = arith.addf %292, %293 : vector<1x8xf32>
    %295 = arith.negf %294 : vector<1x8xf32>
    %296 = math.exp %295 : vector<1x8xf32>
    %cst_112 = arith.constant 1.000000e+00 : f32
    %297 = vector.broadcast %cst_112 : f32 to vector<1x8xf32>
    %298 = arith.addf %297, %296 : vector<1x8xf32>
    %299 = arith.divf %297, %298 : vector<1x8xf32>
    %c0_113 = arith.constant 0 : index
    %c8_114 = arith.constant 8 : index
    %300 = vector.load %arg7[%c0_113, %c8_114] : memref<1x64xf32, #tpu.memory_space<vmem>>, vector<1x8xf32>
    tpu.vector_store %arg7[%c0_113, %c8_114], %299 {strides = array<i32>} : memref<1x64xf32, #tpu.memory_space<vmem>>, vector<1x8xf32>,
    %301 = vector.extract_strided_slice %251 {offsets = [3, 0], sizes = [1, 8], strides = [1, 1]} : vector<8x8xf32> to vector<1x8xf32>
    %302 = vector.extract_strided_slice %277 {offsets = [2, 0], sizes = [1, 8], strides = [1, 1]} : vector<8x8xf32> to vector<1x8xf32>
    %303 = arith.addf %302, %301 : vector<1x8xf32>
    %304 = vector.broadcast %278 : f32 to vector<1x8xf32>
    %305 = arith.addf %303, %304 : vector<1x8xf32>
    %306 = arith.negf %305 : vector<1x8xf32>
    %307 = math.exp %306 : vector<1x8xf32>
    %cst_115 = arith.constant 1.000000e+00 : f32
    %308 = vector.broadcast %cst_115 : f32 to vector<1x8xf32>
    %309 = arith.addf %308, %307 : vector<1x8xf32>
    %310 = arith.divf %308, %309 : vector<1x8xf32>
    %c0_116 = arith.constant 0 : index
    %c16_117 = arith.constant 16 : index
    %311 = vector.load %arg7[%c0_116, %c16_117] : memref<1x64xf32, #tpu.memory_space<vmem>>, vector<1x8xf32>
    tpu.vector_store %arg7[%c0_116, %c16_117], %310 {strides = array<i32>} : memref<1x64xf32, #tpu.memory_space<vmem>>, vector<1x8xf32>,
    %312 = vector.extract_strided_slice %251 {offsets = [4, 0], sizes = [1, 8], strides = [1, 1]} : vector<8x8xf32> to vector<1x8xf32>
    %313 = vector.extract_strided_slice %277 {offsets = [3, 0], sizes = [1, 8], strides = [1, 1]} : vector<8x8xf32> to vector<1x8xf32>
    %314 = arith.addf %313, %312 : vector<1x8xf32>
    %315 = vector.broadcast %278 : f32 to vector<1x8xf32>
    %316 = arith.addf %314, %315 : vector<1x8xf32>
    %317 = arith.negf %316 : vector<1x8xf32>
    %318 = math.exp %317 : vector<1x8xf32>
    %cst_118 = arith.constant 1.000000e+00 : f32
    %319 = vector.broadcast %cst_118 : f32 to vector<1x8xf32>
    %320 = arith.addf %319, %318 : vector<1x8xf32>
    %321 = arith.divf %319, %320 : vector<1x8xf32>
    %c0_119 = arith.constant 0 : index
    %c24_120 = arith.constant 24 : index
    %322 = vector.load %arg7[%c0_119, %c24_120] : memref<1x64xf32, #tpu.memory_space<vmem>>, vector<1x8xf32>
    tpu.vector_store %arg7[%c0_119, %c24_120], %321 {strides = array<i32>} : memref<1x64xf32, #tpu.memory_space<vmem>>, vector<1x8xf32>,
    %323 = vector.extract_strided_slice %251 {offsets = [5, 0], sizes = [1, 8], strides = [1, 1]} : vector<8x8xf32> to vector<1x8xf32>
    %324 = vector.extract_strided_slice %277 {offsets = [4, 0], sizes = [1, 8], strides = [1, 1]} : vector<8x8xf32> to vector<1x8xf32>
    %325 = arith.addf %324, %323 : vector<1x8xf32>
    %326 = vector.broadcast %278 : f32 to vector<1x8xf32>
    %327 = arith.addf %325, %326 : vector<1x8xf32>
    %328 = arith.negf %327 : vector<1x8xf32>
    %329 = math.exp %328 : vector<1x8xf32>
    %cst_121 = arith.constant 1.000000e+00 : f32
    %330 = vector.broadcast %cst_121 : f32 to vector<1x8xf32>
    %331 = arith.addf %330, %329 : vector<1x8xf32>
    %332 = arith.divf %330, %331 : vector<1x8xf32>
    %c0_122 = arith.constant 0 : index
    %c32_123 = arith.constant 32 : index
    %333 = vector.load %arg7[%c0_122, %c32_123] : memref<1x64xf32, #tpu.memory_space<vmem>>, vector<1x8xf32>
    tpu.vector_store %arg7[%c0_122, %c32_123], %332 {strides = array<i32>} : memref<1x64xf32, #tpu.memory_space<vmem>>, vector<1x8xf32>,
    %334 = vector.extract_strided_slice %251 {offsets = [6, 0], sizes = [1, 8], strides = [1, 1]} : vector<8x8xf32> to vector<1x8xf32>
    %335 = vector.extract_strided_slice %277 {offsets = [5, 0], sizes = [1, 8], strides = [1, 1]} : vector<8x8xf32> to vector<1x8xf32>
    %336 = arith.addf %335, %334 : vector<1x8xf32>
    %337 = vector.broadcast %278 : f32 to vector<1x8xf32>
    %338 = arith.addf %336, %337 : vector<1x8xf32>
    %339 = arith.negf %338 : vector<1x8xf32>
    %340 = math.exp %339 : vector<1x8xf32>
    %cst_124 = arith.constant 1.000000e+00 : f32
    %341 = vector.broadcast %cst_124 : f32 to vector<1x8xf32>
    %342 = arith.addf %341, %340 : vector<1x8xf32>
    %343 = arith.divf %341, %342 : vector<1x8xf32>
    %c0_125 = arith.constant 0 : index
    %c40 = arith.constant 40 : index
    %344 = vector.load %arg7[%c0_125, %c40] : memref<1x64xf32, #tpu.memory_space<vmem>>, vector<1x8xf32>
    tpu.vector_store %arg7[%c0_125, %c40], %343 {strides = array<i32>} : memref<1x64xf32, #tpu.memory_space<vmem>>, vector<1x8xf32>,
    %345 = vector.extract_strided_slice %251 {offsets = [7, 0], sizes = [1, 8], strides = [1, 1]} : vector<8x8xf32> to vector<1x8xf32>
    %346 = vector.extract_strided_slice %277 {offsets = [6, 0], sizes = [1, 8], strides = [1, 1]} : vector<8x8xf32> to vector<1x8xf32>
    %347 = arith.addf %346, %345 : vector<1x8xf32>
    %348 = vector.broadcast %278 : f32 to vector<1x8xf32>
    %349 = arith.addf %347, %348 : vector<1x8xf32>
    %350 = arith.negf %349 : vector<1x8xf32>
    %351 = math.exp %350 : vector<1x8xf32>
    %cst_126 = arith.constant 1.000000e+00 : f32
    %352 = vector.broadcast %cst_126 : f32 to vector<1x8xf32>
    %353 = arith.addf %352, %351 : vector<1x8xf32>
    %354 = arith.divf %352, %353 : vector<1x8xf32>
    %c0_127 = arith.constant 0 : index
    %c48 = arith.constant 48 : index
    %355 = vector.load %arg7[%c0_127, %c48] : memref<1x64xf32, #tpu.memory_space<vmem>>, vector<1x8xf32>
    tpu.vector_store %arg7[%c0_127, %c48], %354 {strides = array<i32>} : memref<1x64xf32, #tpu.memory_space<vmem>>, vector<1x8xf32>,
    %356 = vector.extract_strided_slice %277 {offsets = [7, 0], sizes = [1, 8], strides = [1, 1]} : vector<8x8xf32> to vector<1x8xf32>
    %357 = arith.addf %356, %258 : vector<1x8xf32>
    %358 = vector.broadcast %278 : f32 to vector<1x8xf32>
    %359 = arith.addf %357, %358 : vector<1x8xf32>
    %360 = arith.negf %359 : vector<1x8xf32>
    %361 = math.exp %360 : vector<1x8xf32>
    %cst_128 = arith.constant 1.000000e+00 : f32
    %362 = vector.broadcast %cst_128 : f32 to vector<1x8xf32>
    %363 = arith.addf %362, %361 : vector<1x8xf32>
    %364 = arith.divf %362, %363 : vector<1x8xf32>
    %c0_129 = arith.constant 0 : index
    %c56 = arith.constant 56 : index
    %365 = vector.load %arg7[%c0_129, %c56] : memref<1x64xf32, #tpu.memory_space<vmem>>, vector<1x8xf32>
    tpu.vector_store %arg7[%c0_129, %c56], %364 {strides = array<i32>} : memref<1x64xf32, #tpu.memory_space<vmem>>, vector<1x8xf32>,
    %c0_130 = arith.constant 0 : index
    %c0_131 = arith.constant 0 : index
    %366 = vector.load %arg7[%c0_130, %c0_131] : memref<1x64xf32, #tpu.memory_space<vmem>>, vector<1x64xf32>
    %c0_132 = arith.constant 0 : index
    %c0_133 = arith.constant 0 : index
    %c0_134 = arith.constant 0 : index
    %367 = vector.load %arg5[%c0_132, %c0_133, %c0_134] : memref<1x4x64xf32, #tpu.memory_space<vmem>>, vector<1x4x64xf32>
    %368 = vector.shape_cast %367 : vector<1x4x64xf32> to vector<4x64xf32>
    %369 = vector.broadcast %366 : vector<1x64xf32> to vector<4x64xf32>
    %370 = arith.mulf %368, %369 : vector<4x64xf32>
    %c0_135 = arith.constant 0 : index
    %c0_136 = arith.constant 0 : index
    %c0_137 = arith.constant 0 : index
    %371 = vector.load %arg6[%c0_135, %c0_136, %c0_137] : memref<1x4x64xf32, #tpu.memory_space<vmem>>, vector<1x4x64xf32>
    %372 = vector.shape_cast %371 : vector<1x4x64xf32> to vector<4x64xf32>
    %373 = vector.shape_cast %370 : vector<4x64xf32> to vector<1x4x64xf32>
    tpu.vector_store %arg6[%c0_135, %c0_136, %c0_137], %373 {strides = array<i32>} : memref<1x4x64xf32, #tpu.memory_space<vmem>>, vector<1x4x64xf32>,
    return
  }
  func.func @transform_0(%arg0: i32, %arg1: i32) -> i32 {
    %c0_i32 = arith.constant 0 : i32
    %c0_i32_0 = arith.constant 0 : i32
    return %c0_i32 : i32
  }
  func.func @transform_1(%arg0: i32, %arg1: i32) -> (i32, i32, i32, i32) {
    %c0_i32 = arith.constant 0 : i32
    %c0_i32_0 = arith.constant 0 : i32
    %c0_i32_1 = arith.constant 0 : i32
    return %arg0, %c0_i32, %arg1, %c0_i32_0 : i32, i32, i32, i32
  }
  func.func @transform_2(%arg0: i32, %arg1: i32) -> (i32, i32, i32, i32) {
    %c0_i32 = arith.constant 0 : i32
    %c0_i32_0 = arith.constant 0 : i32
    %c0_i32_1 = arith.constant 0 : i32
    return %arg0, %arg1, %c0_i32, %c0_i32_0 : i32, i32, i32, i32
  }
  func.func @transform_3(%arg0: i32, %arg1: i32) -> (i32, i32, i32) {
    %c0_i32 = arith.constant 0 : i32
    %c0_i32_0 = arith.constant 0 : i32
    return %arg0, %c0_i32, %arg1 : i32, i32, i32
  }
  func.func @transform_4(%arg0: i32, %arg1: i32) -> (i32, i32, i32) {
    %c0_i32 = arith.constant 0 : i32
    %c0_i32_0 = arith.constant 0 : i32
    return %arg0, %c0_i32, %arg1 : i32, i32, i32
  }
}

</mosaic_0001>

<llo_original>
// kernel: output_gate.1
$region0: #{output_gate.1}
  #allocation0 [shape = 'u32[]', space=smem, size = 0x4, offset = 0x4, fixed_abs, tag = 'smem constant byte address 0x4 - core index']
  #allocation1 [shape = 'u32[144,128]{1,0:T(1,128)}', space=vmem, size = 0x12000, scoped, tag = 'internal scratch']
  #allocation2 [shape = 'f32[1,64]{1,0:T(1,128)}', space=vmem, size = 0x200, scoped, tag = 'scratch operand']
  %s0 = inlined_call_operand.hbm [shape: f32[37], index: 0, kind: input, shape index: {}]
  %s1 = inlined_call_operand.hbm [shape: f32[2,16,9,9], index: 1, kind: input, shape index: {}]
  %s2 = inlined_call_operand.hbm [shape: f32[2,1,16,9], index: 2, kind: input, shape index: {}]
  %s3 = inlined_call_operand.hbm [shape: f32[2,4,64], index: 3, kind: input, shape index: {}]
  %s4 = inlined_call_operand.hbm [shape: f32[2,4,64], index: 4, kind: output, shape index: {}]
  %s5 = sld [smem:[#allocation0]]
  $region65: #{output_gate.1} parent=0
    _
  %s7 = ssub.s32 1, %s5
  %s8 = scalar_select 0, %s7, %s5
  $region1: #{output_gate.1} parent=0
    #allocation3 [shape = 'u8[512]{0}', space=smem, size = 0x200, scoped, tag = 'input window, operand 0, single buffered']
    #allocation4 [shape = 's32[2]{0}', space=sflag, size = 0x8, scoped, tag = 'scoped memory for output_gate.1']
    #allocation5 [shape = 's32[2]{0}', space=sflag, size = 0x8, scoped, tag = 'scoped memory for output_gate.1']
    #allocation6 [shape = 's32[2]{0}', space=sflag, size = 0x8, scoped, tag = 'scoped memory for output_gate.1']
    #allocation7 [shape = 'u8[262144]{0}', space=vmem, size = 0x40000, scoped, tag = 'input window, operand 1']
    #allocation8 [shape = 'u8[16384]{0}', space=vmem, size = 0x4000, scoped, tag = 'input window, operand 2']
    #allocation9 [shape = 's32[2]{0}', space=sflag, size = 0x8, scoped, tag = 'scoped memory for output_gate.1']
    #allocation10 [shape = 'u8[4096]{0}', space=vmem, size = 0x1000, scoped, tag = 'input window, operand 3']
    #allocation11 [shape = 'u8[4096]{0}', space=vmem, size = 0x1000, scoped, tag = 'output window, operand 0']
    %9 = vsyncpa [#allocation6], 0
    %10 = vsyncpa [#allocation4], 0
    %s11 = scalar_lea.sflag [#allocation4], 1
    %12 = vsyncpa %s11, 0
    %13 = vsyncpa [#allocation9], 0
    %s14 = scalar_lea.sflag [#allocation9], 1
    %15 = vsyncpa %s14, 0
    %16 = vsyncpa [#allocation5], 0
    %s17 = scalar_lea.sflag [#allocation5], 1
    %18 = vsyncpa %s17, 0
    loop: start=0, step=1, limit=4
    $region2: #{output_gate.1} parent=1 // loop_pre_header
      _
    $region3: #{output_gate.1} parent=1 // loop_header
      %s20 = sphi 0, %s24
      %p21 = scmp.ge.s32.totalorder %s20, 4
      %s27 = sphi 0, %s39
      %s28 = sphi 0, %s35
      %s29 = sphi 0, %s27
      %s30 = sphi 0, %s28
      %s31 = sphi 0, %s29
      %s32 = sphi 0, %s30
      %s40 = sphi 0, %s40
      %s42 = sphi 0, %s40
      %s43 = sphi 0, %s42
      %s57 = sphi 0, %s43
      %s65 = sphi 0, %s67
      %s68 = sphi 0, %s65
      %s69 = sphi 0, %s68
      %s85 = sphi 0, %s69
      %s93 = sphi 0, %s95
      %s96 = sphi 0, %s93
      %s97 = sphi 0, %s96
      %s113 = sphi 0, %s97
      %s121 = sphi 0, %s123
      %s124 = sphi 0, %s121
      %s125 = sphi 0, %s124
      %s141 = sphi 0, %s125
      %s149 = sphi 0, %s151
      %s152 = sphi 0, %s149
      %s153 = sphi 0, %s152
      %s169 = sphi 0, %s153
    $region4: #{output_gate.1} parent=1 // loop_header_branch
      %23 = sbr.rel (%p21) target = $region8
    $region5: #{output_gate.1} parent=1 // loop_body
      %s25 = ssub.s32 %s20, 1
      %s26 = ssub.s32 %s20, 2
      %s33 = sadd.s32 1, %s28
      %p34 = scmp.ge.s32.totalorder %s33, 1
      %s35 = scalar_select %p34, 0, %s33
      %s36 = sadd.s32 1, %s27
      %s37 = scalar_select %p34, %s36, %s27
      %p38 = scmp.ge.s32.totalorder %s37, 2
      %s39 = scalar_select %p38, 0, %s37
      %s41 = sadd.s32 %s40, 1
      %p44 = scmp.eq.s32.totalorder %s20, 1
      %p45 = scmp.ne.s32.totalorder %s40, %s42
      %p46 = scmp.eq.s32.totalorder %s20, 0
      %p47 = por %p45, %p46
      %p48 = scmp.ne.s32.totalorder %s40, %s42
      %p49 = scmp.eq.s32.totalorder %s25, 1
      %p50 = por %p48, %p49
      %p51 = scmp.ne.s32.totalorder %s42, %s43
      %p52 = scmp.eq.s32.totalorder %s25, 0
      %p53 = por %p51, %p52
      %p54 = scmp.ne.s32.totalorder %s42, %s43
      %p55 = scmp.eq.s32.totalorder %s26, 1
      %p56 = por %p54, %p55
      %p58 = scmp.ne.s32.totalorder %s43, %s57
      %p59 = scmp.eq.s32.totalorder %s26, 0
      %p60 = por %p58, %p59
      %s61 = ssub.s32 %s27, %s39
      %s62 = ssub.s32 %s28, %s35
      %s63 = sor.u32 %s61, %s62
      %p64 = scmp.eq.s32.totalorder %s63, 0
      %s66 = sadd.s32 %s65, 1
      %s67 = scalar_select %p64, %s65, %s66
      %p70 = pneg %p64
      %p71 = scmp.eq.s32.totalorder %s20, 1
      %p72 = por %p70, %p71
      %p73 = scmp.ne.s32.totalorder %s65, %s68
      %p74 = scmp.eq.s32.totalorder %s20, 0
      %p75 = por %p73, %p74
      %p76 = scmp.ne.s32.totalorder %s65, %s68
      %p77 = scmp.eq.s32.totalorder %s25, 1
      %p78 = por %p76, %p77
      %p79 = scmp.ne.s32.totalorder %s68, %s69
      %p80 = scmp.eq.s32.totalorder %s25, 0
      %p81 = por %p79, %p80
      %p82 = scmp.ne.s32.totalorder %s68, %s69
      %p83 = scmp.eq.s32.totalorder %s26, 1
      %p84 = por %p82, %p83
      %p86 = scmp.ne.s32.totalorder %s69, %s85
      %p87 = scmp.eq.s32.totalorder %s26, 0
      %p88 = por %p86, %p87
      %s89 = ssub.s32 %s27, %s39
      %s90 = ssub.s32 %s28, %s35
      %s91 = sor.u32 %s89, %s90
      %p92 = scmp.eq.s32.totalorder %s91, 0
      %s94 = sadd.s32 %s93, 1
      %s95 = scalar_select %p92, %s93, %s94
      %p98 = pneg %p92
      %p99 = scmp.eq.s32.totalorder %s20, 1
      %p100 = por %p98, %p99
      %p101 = scmp.ne.s32.totalorder %s93, %s96
      %p102 = scmp.eq.s32.totalorder %s20, 0
      %p103 = por %p101, %p102
      %p104 = scmp.ne.s32.totalorder %s93, %s96
      %p105 = scmp.eq.s32.totalorder %s25, 1
      %p106 = por %p104, %p105
      %p107 = scmp.ne.s32.totalorder %s96, %s97
      %p108 = scmp.eq.s32.totalorder %s25, 0
      %p109 = por %p107, %p108
      %p110 = scmp.ne.s32.totalorder %s96, %s97
      %p111 = scmp.eq.s32.totalorder %s26, 1
      %p112 = por %p110, %p111
      %p114 = scmp.ne.s32.totalorder %s97, %s113
      %p115 = scmp.eq.s32.totalorder %s26, 0
      %p116 = por %p114, %p115
      %s117 = ssub.s32 %s27, %s39
      %s118 = ssub.s32 %s28, %s35
      %s119 = sor.u32 %s117, %s118
      %p120 = scmp.eq.s32.totalorder %s119, 0
      %s122 = sadd.s32 %s121, 1
      %s123 = scalar_select %p120, %s121, %s122
      %p126 = pneg %p120
      %p127 = scmp.eq.s32.totalorder %s20, 1
      %p128 = por %p126, %p127
      %p129 = scmp.ne.s32.totalorder %s121, %s124
      %p130 = scmp.eq.s32.totalorder %s20, 0
      %p131 = por %p129, %p130
      %p132 = scmp.ne.s32.totalorder %s121, %s124
      %p133 = scmp.eq.s32.totalorder %s25, 1
      %p134 = por %p132, %p133
      %p135 = scmp.ne.s32.totalorder %s124, %s125
      %p136 = scmp.eq.s32.totalorder %s25, 0
      %p137 = por %p135, %p136
      %p138 = scmp.ne.s32.totalorder %s124, %s125
      %p139 = scmp.eq.s32.totalorder %s26, 1
      %p140 = por %p138, %p139
      %p142 = scmp.ne.s32.totalorder %s125, %s141
      %p143 = scmp.eq.s32.totalorder %s26, 0
      %p144 = por %p142, %p143
      %s145 = ssub.s32 %s27, %s39
      %s146 = ssub.s32 %s28, %s35
      %s147 = sor.u32 %s145, %s146
      %p148 = scmp.eq.s32.totalorder %s147, 0
      %s150 = sadd.s32 %s149, 1
      %s151 = scalar_select %p148, %s149, %s150
      %p154 = pneg %p148
      %p155 = scmp.eq.s32.totalorder %s20, 1
      %p156 = por %p154, %p155
      %p157 = scmp.ne.s32.totalorder %s149, %s152
      %p158 = scmp.eq.s32.totalorder %s20, 0
      %p159 = por %p157, %p158
      %p160 = scmp.ne.s32.totalorder %s149, %s152
      %p161 = scmp.eq.s32.totalorder %s25, 1
      %p162 = por %p160, %p161
      %p163 = scmp.ne.s32.totalorder %s152, %s153
      %p164 = scmp.eq.s32.totalorder %s25, 0
      %p165 = por %p163, %p164
      %p166 = scmp.ne.s32.totalorder %s152, %s153
      %p167 = scmp.eq.s32.totalorder %s26, 1
      %p168 = por %p166, %p167
      %p170 = scmp.ne.s32.totalorder %s153, %s169
      %p171 = scmp.eq.s32.totalorder %s26, 0
      %p172 = por %p170, %p171
      %p173 = scmp.le.s32.totalorder 1, %s20
      %p174 = scmp.lt.s32.totalorder %s20, 3
      %p175 = pnand %p173, %p174
      %p176 = pneg %p175
      // Predicated region
      $region9: #{output_gate.1} parent=5 // pred_check
        _
      $region10: #{output_gate.1} parent=5 // pred_check_branch
        %178 = sbr.rel (%p175) target = $region12
      $region11: #{output_gate.1} parent=5 // pred_region
        %s179 = ssub.s32 %s20, 1
        // Predicated region
        $region13: #{output_gate.1} parent=11 // pred_check
          %p180 = pneg %p53
        $region14: #{output_gate.1} parent=11 // pred_check_branch
          %182 = sbr.rel (%p180) target = $region16
        $region15: #{output_gate.1} parent=11 // pred_region
          %s184 = ssub.s32 16, 16
          %185 = vsyncadd [#allocation6], %s184
          %188 = dma.hbm_to_smem %s0, 16, [#allocation3], [#allocation6]
        $region16: #{output_gate.1} parent=11 // pred_fallthru
          _
      $region12: #{output_gate.1} parent=5 // pred_fallthru
        _
      %p189 = scmp.lt.s32.totalorder %s20, 2
      // Predicated region
      $region17: #{output_gate.1} parent=5 // pred_check
        %p190 = pneg %p189
      $region18: #{output_gate.1} parent=5 // pred_check_branch
        %192 = sbr.rel (%p190) target = $region20
      $region19: #{output_gate.1} parent=5 // pred_region
        // Predicated region
        $region21: #{output_gate.1} parent=19 // pred_check
          %p193 = pneg %p75
        $region22: #{output_gate.1} parent=19 // pred_check_branch
          %195 = sbr.rel (%p193) target = $region24
        $region23: #{output_gate.1} parent=19 // pred_region
          %s196 = sand.u32 %s65, 1
          %s197 = scalar_lea.sflag [#allocation4], %s196
          %s198 = sand.u32 %s65, 1
          %s199 = smul.addr %s198, 256
          %s200 = scalar_lea.vmem [#allocation7], %s199
          %s201 = smul.u32 2, %s28
          %s203 = ssub.s32 4096, 4096
          %204 = vsyncadd %s197, %s203
          %s205 = smul.addr %s27, 32
          %s206 = sadd.s32 %s201, %s205
          %s207 = smul.addr %s206, 128
          %s208 = scalar_lea.hbm %s1, %s207
          %s209 = sshll.u32 %s200, 4
          %s210 = int_to_ptr.vmem [resolvable:$true] %s209
          %215 = dma.hbm_to_vmem [thread:$0]  %s208, 4096, %s210, %s197, 128, 128, 8
        $region24: #{output_gate.1} parent=19 // pred_fallthru
          _
        // Predicated region
        $region25: #{output_gate.1} parent=19 // pred_check
          %p216 = pneg %p103
        $region26: #{output_gate.1} parent=19 // pred_check_branch
          %218 = sbr.rel (%p216) target = $region28
        $region27: #{output_gate.1} parent=19 // pred_region
          %s219 = sand.u32 %s20, 1
          %s220 = scalar_lea.sflag [#allocation9], %s219
          %s221 = sand.u32 %s93, 1
          %s222 = smul.addr %s221, 16
          %s223 = scalar_lea.vmem [#allocation8], %s222
          %s225 = ssub.s32 256, 256
          %226 = vsyncadd %s220, %s225
          %s227 = smul.addr %s28, 2
          %s228 = smul.addr %s27, 2
          %s229 = sadd.s32 %s227, %s228
          %s230 = smul.addr %s229, 128
          %s231 = scalar_lea.hbm %s2, %s230
          %s232 = sshll.u32 %s223, 4
          %s233 = int_to_ptr.vmem [resolvable:$true] %s232
          %238 = dma.hbm_to_vmem [thread:$0]  %s231, 256, %s233, %s220, 128, 128, 8
        $region28: #{output_gate.1} parent=19 // pred_fallthru
          _
        // Predicated region
        $region29: #{output_gate.1} parent=19 // pred_check
          %p239 = pneg %p131
        $region30: #{output_gate.1} parent=19 // pred_check_branch
          %241 = sbr.rel (%p239) target = $region32
        $region31: #{output_gate.1} parent=19 // pred_region
          %s242 = sand.u32 %s20, 1
          %s243 = scalar_lea.sflag [#allocation9], %s242
          %s244 = sand.u32 %s121, 1
          %s245 = smul.addr %s244, 4
          %s246 = scalar_lea.vmem [#allocation10], %s245
          %s248 = ssub.s32 64, 64
          %249 = vsyncadd %s243, %s248
          %s250 = sadd.s32 %s28, %s27
          %s251 = smul.addr %s250, 64
          %s252 = scalar_lea.hbm %s3, %s251
          %s254 = sshll.u32 %s246, 4
          %s255 = int_to_ptr.vmem [resolvable:$true] %s254
          %257 = dma.hbm_to_vmem [thread:$0]  %s252, 64, %s255, %s243
        $region32: #{output_gate.1} parent=19 // pred_fallthru
          _
      $region20: #{output_gate.1} parent=5 // pred_fallthru
        _
      %p258 = scmp.le.s32.totalorder 1, %s20
      %p259 = scmp.lt.s32.totalorder %s20, 3
      %p260 = pnand %p258, %p259
      %p261 = pneg %p260
      // Predicated region
      $region33: #{output_gate.1} parent=5 // pred_check
        _
      $region34: #{output_gate.1} parent=5 // pred_check_branch
        %263 = sbr.rel (%p260) target = $region36
      $region35: #{output_gate.1} parent=5 // pred_region
        %s264 = ssub.s32 %s20, 1
        // Predicated region
        $region37: #{output_gate.1} parent=35 // pred_check
          %p265 = pneg %p53
        $region38: #{output_gate.1} parent=35 // pred_check_branch
          %267 = sbr.rel (%p265) target = $region40
        $region39: #{output_gate.1} parent=35 // pred_region
          %268 = dma.done [#allocation6], 16
        $region40: #{output_gate.1} parent=35 // pred_fallthru
          _
        %s269 = sand.u32 %s68, 1
        %s270 = scalar_lea.sflag [#allocation4], %s269
        %s271 = sand.u32 %s68, 1
        %s272 = smul.addr %s271, 256
        %s273 = scalar_lea.vmem [#allocation7], %s272
        // Predicated region
        $region41: #{output_gate.1} parent=35 // pred_check
          %p274 = pneg %p81
        $region42: #{output_gate.1} parent=35 // pred_check_branch
          %276 = sbr.rel (%p274) target = $region44
        $region43: #{output_gate.1} parent=35 // pred_region
          %277 = dma.done %s270, 4096
        $region44: #{output_gate.1} parent=35 // pred_fallthru
          _
        %s278 = sand.u32 %s25, 1
        %s279 = scalar_lea.sflag [#allocation9], %s278
        %s280 = sand.u32 %s96, 1
        %s281 = smul.addr %s280, 16
        %s282 = scalar_lea.vmem [#allocation8], %s281
        // Predicated region
        $region45: #{output_gate.1} parent=35 // pred_check
          %p283 = pneg %p109
        $region46: #{output_gate.1} parent=35 // pred_check_branch
          %285 = sbr.rel (%p283) target = $region48
        $region47: #{output_gate.1} parent=35 // pred_region
          %286 = dma.done %s279, 256
        $region48: #{output_gate.1} parent=35 // pred_fallthru
          _
        %s287 = sand.u32 %s25, 1
        %s288 = scalar_lea.sflag [#allocation9], %s287
        %s289 = sand.u32 %s124, 1
        %s290 = smul.addr %s289, 4
        %s291 = scalar_lea.vmem [#allocation10], %s290
        // Predicated region
        $region49: #{output_gate.1} parent=35 // pred_check
          %p292 = pneg %p137
        $region50: #{output_gate.1} parent=35 // pred_check_branch
          %294 = sbr.rel (%p292) target = $region52
        $region51: #{output_gate.1} parent=35 // pred_region
          %295 = dma.done %s288, 64
        $region52: #{output_gate.1} parent=35 // pred_fallthru
          _
        %296 = sfence
        %p297 = pneg %p53
        %p298 = pneg %p50
        %s299 = sand.u32 %s68, 1
        %s300 = scalar_lea.sflag [#allocation4], %s299
        %s301 = sand.u32 %s68, 1
        %s302 = smul.addr %s301, 256
        %s303 = scalar_lea.vmem [#allocation7], %s302
        %p304 = pneg %p81
        %p305 = pneg %p78
        %s306 = sand.u32 %s25, 1
        %s307 = scalar_lea.sflag [#allocation9], %s306
        %s308 = sand.u32 %s96, 1
        %s309 = smul.addr %s308, 16
        %s310 = scalar_lea.vmem [#allocation8], %s309
        %p311 = pneg %p109
        %p312 = pneg %p106
        %s313 = sand.u32 %s25, 1
        %s314 = scalar_lea.sflag [#allocation9], %s313
        %s315 = sand.u32 %s124, 1
        %s316 = smul.addr %s315, 4
        %s317 = scalar_lea.vmem [#allocation10], %s316
        %p318 = pneg %p137
        %p319 = pneg %p134
        %p320 = pneg %p165
        %p321 = pneg %p162
        %s322 = sand.u32 %s152, 1
        %s323 = scalar_lea.sflag [#allocation5], %s322
        %s324 = sand.u32 %s152, 1
        %s325 = smul.addr %s324, 4
        %s326 = scalar_lea.vmem [#allocation11], %s325
        %s327 = smul.u32 2, %s30
        %v328 = vld [vmem:[%s273] sm:$0xff]
        %s329 = sld [smem:[#allocation3]]
        %v330 = vstv %s329
        %v331 = vmul.f32 %v330, %v328
        %v332 = vadd.f32 %v331, 0.0
        %s333 = sld [smem:[#allocation3 + $0x2]]
        %v334 = vstv %s333
        %v335 = vmul.f32 %v334, %v328
        %337 = vrot.lane.b32.xlu0 %v335, 127
        %v338 = vpop.permute.xlu0 %337
        %v340 = vadd.f32 %v332, %v338
        %s341 = sld [smem:[#allocation3 + $0x6]]
        %v342 = vstv %s341
        %v343 = vmul.f32 %v342, %v328
        %v344 = vadd.f32 %v343, 0.0
        %s345 = sld [smem:[#allocation3 + $0x8]]
        %v346 = vstv %s345
        %v347 = vmul.f32 %v346, %v328
        %349 = vrot.lane.b32.xlu0 %v347, 127
        %v350 = vpop.permute.xlu0 %349
        %v352 = vadd.f32 %v344, %v350
        %v353 = vld [vmem:[%s282] sm:$0x1]
        %v354 = vmul.f32 %v342, %v353
        %v355 = vadd.f32 %v354, 0.0
        %v356 = vmul.f32 %v346, %v353
        %358 = vrot.lane.b32.xlu0 %v356, 127
        %v359 = vpop.permute.xlu0 %358
        %v361 = vadd.f32 %v355, %v359
        %s362 = scalar_lea.vmem %s273, 64 [#allocation7]
        %v363 = vld [vmem:[%s362] sm:$0xff]
        %s364 = sld [smem:[#allocation3 + $0x1]]
        %v365 = vstv %s364
        %v366 = vmul.f32 %v365, %v363
        %v367 = vadd.f32 %v340, %v366
        %s368 = sld [smem:[#allocation3 + $0x7]]
        %v369 = vstv %s368
        %v370 = vmul.f32 %v369, %v363
        %v371 = vadd.f32 %v352, %v370
        %v372 = vld [vmem:[%s282 + $0x4] sm:$0x1]
        %v373 = vmul.f32 %v369, %v372
        %v374 = vadd.f32 %v361, %v373
        %s375 = scalar_lea.vmem %s273, 128 [#allocation7]
        %v376 = vld [vmem:[%s375] sm:$0xff]
        %s377 = sld [smem:[#allocation3 + $0x3]]
        %v378 = vstv %s377
        %v379 = vmul.f32 %v378, %v376
        %v380 = vadd.f32 %v367, %v379
        %s381 = sld [smem:[#allocation3 + $0x5]]
        %v382 = vstv %s381
        %v383 = vmul.f32 %v382, %v376
        %385 = vrot.lane.b32.xlu0 %v383, 127
        %v386 = vpop.permute.xlu0 %385
        %v388 = vadd.f32 %v380, %v386
        %s389 = scalar_lea.vmem %s273, 192 [#allocation7]
        %v390 = vld [vmem:[%s389] sm:$0xff]
        %s391 = sld [smem:[#allocation3 + $0x4]]
        %v392 = vstv %s391
        %v393 = vmul.f32 %v392, %v390
        %v394 = vadd.f32 %v388, %v393
        %s395 = scalar_lea.vmem %s273, 16 [#allocation7]
        %v396 = vld [vmem:[%s395] sm:$0xff]
        %s397 = sld [smem:[#allocation3 + $0x9]]
        %v398 = vstv %s397
        %v399 = vmul.f32 %v398, %v396
        %v400 = vadd.f32 %v394, %v399
        %s401 = sld [smem:[#allocation3 + $0xb]]
        %v402 = vstv %s401
        %v403 = vmul.f32 %v402, %v396
        %405 = vrot.lane.b32.xlu0 %v403, 127
        %v406 = vpop.permute.xlu0 %405
        %v408 = vadd.f32 %v400, %v406
        %s409 = sld [smem:[#allocation3 + $0xf]]
        %v410 = vstv %s409
        %v411 = vmul.f32 %v410, %v396
        %v412 = vadd.f32 %v371, %v411
        %s413 = sld [smem:[#allocation3 + $0x11]]
        %v414 = vstv %s413
        %v415 = vmul.f32 %v414, %v396
        %417 = vrot.lane.b32.xlu0 %v415, 127
        %v418 = vpop.permute.xlu0 %417
        %v420 = vadd.f32 %v412, %v418
        %v421 = vld [vmem:[%s282 + $0x1] sm:$0x1]
        %v422 = vmul.f32 %v410, %v421
        %v423 = vadd.f32 %v374, %v422
        %v424 = vmul.f32 %v414, %v421
        %426 = vrot.lane.b32.xlu0 %v424, 127
        %v427 = vpop.permute.xlu0 %426
        %v429 = vadd.f32 %v423, %v427
        %s430 = scalar_lea.vmem %s273, 80 [#allocation7]
        %v431 = vld [vmem:[%s430] sm:$0xff]
        %s432 = sld [smem:[#allocation3 + $0xa]]
        %v433 = vstv %s432
        %v434 = vmul.f32 %v433, %v431
        %v435 = vadd.f32 %v408, %v434
        %s436 = sld [smem:[#allocation3 + $0x10]]
        %v437 = vstv %s436
        %v438 = vmul.f32 %v437, %v431
        %v439 = vadd.f32 %v420, %v438
        %v440 = vld [vmem:[%s282 + $0x5] sm:$0x1]
        %v441 = vmul.f32 %v437, %v440
        %v442 = vadd.f32 %v429, %v441
        %s443 = scalar_lea.vmem %s273, 144 [#allocation7]
        %v444 = vld [vmem:[%s443] sm:$0xff]
        %s445 = sld [smem:[#allocation3 + $0xc]]
        %v446 = vstv %s445
        %v447 = vmul.f32 %v446, %v444
        %v448 = vadd.f32 %v435, %v447
        %s449 = sld [smem:[#allocation3 + $0xe]]
        %v450 = vstv %s449
        %v451 = vmul.f32 %v450, %v444
        %453 = vrot.lane.b32.xlu0 %v451, 127
        %v454 = vpop.permute.xlu0 %453
        %v456 = vadd.f32 %v448, %v454
        %s457 = scalar_lea.vmem %s273, 208 [#allocation7]
        %v458 = vld [vmem:[%s457] sm:$0xff]
        %s459 = sld [smem:[#allocation3 + $0xd]]
        %v460 = vstv %s459
        %v461 = vmul.f32 %v460, %v458
        %v462 = vadd.f32 %v456, %v461
        %s463 = scalar_lea.vmem %s273, 32 [#allocation7]
        %v464 = vld [vmem:[%s463] sm:$0xff]
        %s465 = sld [smem:[#allocation3 + $0x12]]
        %v466 = vstv %s465
        %v467 = vmul.f32 %v466, %v464
        %v468 = vadd.f32 %v462, %v467
        %s469 = sld [smem:[#allocation3 + $0x14]]
        %v470 = vstv %s469
        %v471 = vmul.f32 %v470, %v464
        %473 = vrot.lane.b32.xlu0 %v471, 127
        %v474 = vpop.permute.xlu0 %473
        %v476 = vadd.f32 %v468, %v474
        %s477 = sld [smem:[#allocation3 + $0x18]]
        %v478 = vstv %s477
        %v479 = vmul.f32 %v478, %v464
        %v480 = vadd.f32 %v439, %v479
        %s481 = sld [smem:[#allocation3 + $0x1a]]
        %v482 = vstv %s481
        %v483 = vmul.f32 %v482, %v464
        %485 = vrot.lane.b32.xlu0 %v483, 127
        %v486 = vpop.permute.xlu0 %485
        %v488 = vadd.f32 %v480, %v486
        %v489 = vld [vmem:[%s282 + $0x2] sm:$0x1]
        %v490 = vmul.f32 %v478, %v489
        %v491 = vadd.f32 %v442, %v490
        %v492 = vmul.f32 %v482, %v489
        %494 = vrot.lane.b32.xlu0 %v492, 127
        %v495 = vpop.permute.xlu0 %494
        %v497 = vadd.f32 %v491, %v495
        %s498 = scalar_lea.vmem %s273, 96 [#allocation7]
        %v499 = vld [vmem:[%s498] sm:$0xff]
        %s500 = sld [smem:[#allocation3 + $0x13]]
        %v501 = vstv %s500
        %v502 = vmul.f32 %v501, %v499
        %v503 = vadd.f32 %v476, %v502
        %s504 = sld [smem:[#allocation3 + $0x19]]
        %v505 = vstv %s504
        %v506 = vmul.f32 %v505, %v499
        %v507 = vadd.f32 %v488, %v506
        %v508 = vld [vmem:[%s282 + $0x6] sm:$0x1]
        %v509 = vmul.f32 %v505, %v508
        %v510 = vadd.f32 %v497, %v509
        %s511 = scalar_lea.vmem %s273, 160 [#allocation7]
        %v512 = vld [vmem:[%s511] sm:$0xff]
        %s513 = sld [smem:[#allocation3 + $0x15]]
        %v514 = vstv %s513
        %v515 = vmul.f32 %v514, %v512
        %v516 = vadd.f32 %v503, %v515
        %s517 = sld [smem:[#allocation3 + $0x17]]
        %v518 = vstv %s517
        %v519 = vmul.f32 %v518, %v512
        %521 = vrot.lane.b32.xlu0 %v519, 127
        %v522 = vpop.permute.xlu0 %521
        %v524 = vadd.f32 %v516, %v522
        %s525 = scalar_lea.vmem %s273, 224 [#allocation7]
        %v526 = vld [vmem:[%s525] sm:$0xff]
        %s527 = sld [smem:[#allocation3 + $0x16]]
        %v528 = vstv %s527
        %v529 = vmul.f32 %v528, %v526
        %v530 = vadd.f32 %v524, %v529
        %s531 = scalar_lea.vmem %s273, 48 [#allocation7]
        %v532 = vld [vmem:[%s531] sm:$0xff]
        %s533 = sld [smem:[#allocation3 + $0x1b]]
        %v534 = vstv %s533
        %v535 = vmul.f32 %v534, %v532
        %v536 = vadd.f32 %v530, %v535
        %s537 = sld [smem:[#allocation3 + $0x1d]]
        %v538 = vstv %s537
        %v539 = vmul.f32 %v538, %v532
        %541 = vrot.lane.b32.xlu0 %v539, 127
        %v542 = vpop.permute.xlu0 %541
        %v544 = vadd.f32 %v536, %v542
        %s545 = sld [smem:[#allocation3 + $0x21]]
        %v546 = vstv %s545
        %v547 = vmul.f32 %v546, %v532
        %v548 = vadd.f32 %v507, %v547
        %s549 = sld [smem:[#allocation3 + $0x23]]
        %v550 = vstv %s549
        %v551 = vmul.f32 %v550, %v532
        %553 = vrot.lane.b32.xlu0 %v551, 127
        %v554 = vpop.permute.xlu0 %553
        %v556 = vadd.f32 %v548, %v554
        %v557 = vld [vmem:[%s282 + $0x3] sm:$0x1]
        %v558 = vmul.f32 %v546, %v557
        %v559 = vadd.f32 %v510, %v558
        %v560 = vmul.f32 %v550, %v557
        %562 = vrot.lane.b32.xlu0 %v560, 127
        %v563 = vpop.permute.xlu0 %562
        %v565 = vadd.f32 %v559, %v563
        %s566 = scalar_lea.vmem %s273, 112 [#allocation7]
        %v567 = vld [vmem:[%s566] sm:$0xff]
        %s568 = sld [smem:[#allocation3 + $0x1c]]
        %v569 = vstv %s568
        %v570 = vmul.f32 %v569, %v567
        %v571 = vadd.f32 %v544, %v570
        %s572 = sld [smem:[#allocation3 + $0x22]]
        %v573 = vstv %s572
        %v574 = vmul.f32 %v573, %v567
        %v575 = vadd.f32 %v556, %v574
        %v576 = vld [vmem:[%s282 + $0x7] sm:$0x1]
        %v577 = vmul.f32 %v573, %v576
        %v578 = vadd.f32 %v565, %v577
        %s579 = scalar_lea.vmem %s273, 176 [#allocation7]
        %v580 = vld [vmem:[%s579] sm:$0xff]
        %s581 = sld [smem:[#allocation3 + $0x1e]]
        %v582 = vstv %s581
        %v583 = vmul.f32 %v582, %v580
        %v584 = vadd.f32 %v571, %v583
        %s585 = sld [smem:[#allocation3 + $0x20]]
        %v586 = vstv %s585
        %v587 = vmul.f32 %v586, %v580
        %589 = vrot.lane.b32.xlu0 %v587, 127
        %v590 = vpop.permute.xlu0 %589
        %v592 = vadd.f32 %v584, %v590
        %s593 = scalar_lea.vmem %s273, 240 [#allocation7]
        %v594 = vld [vmem:[%s593] sm:$0xff]
        %s595 = sld [smem:[#allocation3 + $0x1f]]
        %v596 = vstv %s595
        %v597 = vmul.f32 %v596, %v594
        %v598 = vadd.f32 %v592, %v597
        %s599 = sld [smem:[#allocation3 + $0x24]]
        %v601 = vrot.slane %v575, 1
        %v603 = vadd.f32 %v598, %v601
        %v604 = vstv %s599
        %v605 = vadd.f32 %v603, %v604
        %v606 = vxor.u32 %v605, 2147483648
        %v607 = vmul.f32 %v606, 1.442695
        %v608 = vpow.pop %v607
        %v609 = vadd.f32 %v608, 1.0
        %v610 = vrcp.pop %v609
        %v611 = vmul.f32 1.0, %v610
        %vm612 = vcmask 57344
        %613 = vst.msk [vmem:[#allocation2] sm:$0x1] %vm612, %v611
        %615 = vrot.lane.b32.xlu0 %v611, 8
        %v616 = vpop.permute.xlu0 %615
        %vm618 = vcmask 123969
        %619 = vst.msk [vmem:[#allocation2 - $0x1] sm:$0x2] %vm618, %v616
        %620 = vrot.lane.b32.xlu0 %v611, 16
        %v621 = vpop.permute.xlu0 %620
        %vm623 = vcmask 190594
        %624 = vst.msk [vmem:[#allocation2 - $0x2] sm:$0x4] %vm623, %v621
        %625 = vrot.lane.b32.xlu0 %v611, 24
        %v626 = vpop.permute.xlu0 %625
        %vm628 = vcmask 257219
        %629 = vst.msk [vmem:[#allocation2 - $0x3] sm:$0x8] %vm628, %v626
        %630 = vrot.lane.b32.xlu0 %v611, 32
        %v631 = vpop.permute.xlu0 %630
        %vm633 = vcmask 323844
        %634 = vst.msk [vmem:[#allocation2 - $0x4] sm:$0x10] %vm633, %v631
        %635 = vrot.lane.b32.xlu0 %v611, 40
        %v636 = vpop.permute.xlu0 %635
        %vm638 = vcmask 390469
        %639 = vst.msk [vmem:[#allocation2 - $0x5] sm:$0x20] %vm638, %v636
        %640 = vrot.lane.b32.xlu0 %v611, 48
        %v641 = vpop.permute.xlu0 %640
        %vm643 = vcmask 457094
        %644 = vst.msk [vmem:[#allocation2 - $0x6] sm:$0x40] %vm643, %v641
        %v646 = vrot.slane %v578, 1
        %v648 = vadd.f32 %v598, %v646
        %v649 = vadd.f32 %v648, %v604
        %v650 = vxor.u32 %v649, 2147483648
        %v651 = vmul.f32 %v650, 1.442695
        %v652 = vpow.pop %v651
        %v653 = vadd.f32 %v652, 1.0
        %v654 = vrcp.pop %v653
        %v655 = vmul.f32 1.0, %v654
        %657 = vrot.lane.b32.xlu0 %v655, 56
        %v658 = vpop.permute.xlu0 %657
        %vm660 = vcmask 523719
        %661 = vst.msk [vmem:[#allocation2 - $0x7] sm:$0x80] %vm660, %v658
        %v662 = vld [vmem:[#allocation2] sm:$0x1]
        %v663 = vld [vmem:[%s291] sm:$0xf]
        %v665 = vlaneseq
        %v666 = vshrl.u32 %v665, 7
        %v667 = vsub.s32 0, %v666
        %v668 = vrot.slane %v662, %v667
        %v670 = vmul.f32 %v663, %v668
        %vm671 = vcmask 519168
        %672 = vst.msk [vmem:[%s326] sm:$0xf] %vm671, %v670
        %s673 = sand.u32 %s152, 1
        %s674 = scalar_lea.sflag [#allocation5], %s673
        %s675 = sand.u32 %s152, 1
        %s676 = smul.addr %s675, 4
        %s677 = scalar_lea.vmem [#allocation11], %s676
        // Predicated region
        $region53: #{output_gate.1} parent=35 // pred_check
          %p678 = pneg %p162
        $region54: #{output_gate.1} parent=35 // pred_check_branch
          %680 = sbr.rel (%p678) target = $region56
        $region55: #{output_gate.1} parent=35 // pred_region
          %s682 = ssub.s32 64, 64
          %683 = vsyncadd %s674, %s682
          %s684 = sadd.s32 %s30, %s29
          %s685 = smul.addr %s684, 64
          %s686 = scalar_lea.hbm %s4, %s685
          %s688 = sshll.u32 %s677, 4
          %s689 = int_to_ptr.vmem [resolvable:$true] %s688
          %691 = dma.vmem_to_hbm [thread:$0]  %s689, 64, %s686, %s674
        $region56: #{output_gate.1} parent=35 // pred_fallthru
          _
      $region36: #{output_gate.1} parent=5 // pred_fallthru
        _
      %p692 = scmp.le.s32.totalorder 2, %s20
      // Predicated region
      $region57: #{output_gate.1} parent=5 // pred_check
        %p693 = pneg %p692
      $region58: #{output_gate.1} parent=5 // pred_check_branch
        %695 = sbr.rel (%p693) target = $region60
      $region59: #{output_gate.1} parent=5 // pred_region
        %s696 = ssub.s32 %s20, 2
        // Predicated region
        $region61: #{output_gate.1} parent=59 // pred_check
          %p697 = pneg %p168
        $region62: #{output_gate.1} parent=59 // pred_check_branch
          %699 = sbr.rel (%p697) target = $region64
        $region63: #{output_gate.1} parent=59 // pred_region
          %s700 = sand.u32 %s153, 1
          %s701 = scalar_lea.sflag [#allocation5], %s700
          %s702 = sand.u32 %s153, 1
          %s703 = smul.addr %s702, 4
          %s704 = scalar_lea.vmem [#allocation11], %s703
          %705 = dma.done %s701, 64
        $region64: #{output_gate.1} parent=59 // pred_fallthru
          _
      $region60: #{output_gate.1} parent=5 // pred_fallthru
        _
    $region6: #{output_gate.1} parent=1 // loop_footer
      %s24 = sadd.s32 1, %s20
    $region7: #{output_gate.1} parent=1 // loop_footer_branch
      %19 = sbr.rel target = $region3
    $region8: #{output_gate.1} parent=1 // loop_exit
      _
    %706 = vsyncpa [#allocation4], 1
    %s707 = scalar_lea.sflag [#allocation4], 1
    %708 = vsyncpa %s707, 1
    %709 = vsyncpa [#allocation9], 1
    %s710 = scalar_lea.sflag [#allocation9], 1
    %711 = vsyncpa %s710, 1
    %712 = vsyncpa [#allocation5], 1
    %s713 = scalar_lea.sflag [#allocation5], 1
    %714 = vsyncpa %s713, 1
    %715 = vsyncpa [#allocation6], 1
    %s716 = scalar_lea.sflag [#allocation6], 1
    %717 = vsyncpa %s716, 1

</llo_original>
